<compile_context>
chip_gen: v7x
topology: tpu7x:2x2x1
jax: 0.10.0
libtpu: 0.0.40
codegen_flags: <defaults>
</compile_context>

<pallas_src>
import functools

import jax
import jax.numpy as jnp
from jax import lax
from jax.experimental import pallas as pl
from jax.experimental.pallas import tpu as pltpu


# ----------------------------------------------------------------------------
# In-kernel special functions (elementwise; VPU + EUP only)
# ----------------------------------------------------------------------------
_LANCZOS_G = 7.0
_LANCZOS_COEF = (
    0.99999999999980993,
    676.5203681218851,
    -1259.1392167224028,
    771.32342877765313,
    -176.61502916214059,
    12.507343278686905,
    -0.13857109526572012,
    9.9843695780195716e-6,
    1.5056327351493116e-7,
)
_HALF_LOG_2PI = 0.9189385332046727  # 0.5 * log(2*pi)


def _sum_all(x):
    # full reduction of a 2-D tile kept as a (1, 1) array
    return jnp.sum(jnp.sum(x, axis=1, keepdims=True), axis=0, keepdims=True)


def _lgamma_digamma(x):
    # The 8 reciprocals 1/(x+k), k=0..7, are computed ONCE and shared between
    # the Lanczos lgamma series and the digamma recurrence + asymptotic series.
    # Valid for x > 0.
    recips = [1.0 / (x + float(k)) for k in range(8)]

    # Lanczos lgamma (g = 7, 9 coefficients)
    a = jnp.full_like(x, _LANCZOS_COEF[0])
    for i in range(1, 9):
        a = a + _LANCZOS_COEF[i] * recips[i - 1]
    t = x + (_LANCZOS_G - 0.5)
    lg = _HALF_LOG_2PI + (x - 0.5) * jnp.log(t) - t + jnp.log(a)

    # digamma(x) = digamma(x+7) - sum_{k=0}^{6} 1/(x+k); asymptotic at z = x+7
    acc = recips[0]
    for k in range(1, 7):
        acc = acc + recips[k]
    z = x + 7.0
    inv = recips[7]                       # 1/(x+7), already computed
    inv2 = inv * inv
    dg = (jnp.log(z) - 0.5 * inv
          - inv2 * (1.0 / 12.0 - inv2 * (1.0 / 120.0 - inv2 / 252.0))) - acc
    return lg, dg


# ----------------------------------------------------------------------------
# The single fused kernel
# ----------------------------------------------------------------------------
def _fused_loss_kernel(prior_term_ref,   # SMEM (1,1): 3*K*B * sum(lgamma(prior))
                       zs_ref,           # VMEM (3, B, Dm): shared{1,2,3}_mlp
                       feats_ref,        # VMEM (9, B, Df): ori1..3, rec pairs
                       prior_ref,        # VMEM (1, Da)
                       alphas_ref,       # VMEM (3*K*B, Da)
                       out_ref,          # VMEM (1, 1)
                       *, inv_temp):
    inv_t = jnp.float32(inv_temp)        # constant-folded (static temperature)

    def center_norm_stack(x):
        # Per leading index v: (x - x.mean()) followed by F.normalize(., dim=1)
        _, bb, dd = x.shape
        s = jnp.sum(jnp.sum(x, axis=2, keepdims=True), axis=1, keepdims=True)
        x = x - s * (1.0 / float(bb * dd))
        nrm = jnp.sqrt(jnp.sum(x * x, axis=2, keepdims=True))
        return x / jnp.maximum(nrm, 1e-12)

    # ---- contrastive: 3 NT-Xent pairs from ONE (3B,3B) similarity ----------
    # NOTE: assumes the standard "Contrastive Clustering" InstanceLoss
    # (CrossEntropy over [pos, negatives] with sum-reduction, divided by 2B).
    zs = center_norm_stack(zs_ref[...].astype(jnp.float32))   # (3, B, Dm)
    nv, b, dm = zs.shape
    n3 = nv * b
    z_flat = zs.reshape(n3, dm)
    sim = lax.dot_general(z_flat, z_flat, (((1,), (1,)), ((), ())),
                          preferred_element_type=jnp.float32) * inv_t
    rows = lax.broadcasted_iota(jnp.int32, (n3, n3), 0)
    cols = lax.broadcasted_iota(jnp.int32, (n3, n3), 1)
    sim_nd = jnp.where(rows == cols, jnp.float32(-1e30), sim)
    m = jnp.max(sim_nd, axis=1, keepdims=True)                 # (3B, 1)
    e = jnp.exp(sim_nd - m)                                    # diag -> 0
    # per-view block column sums: blk[v][i] = sum_j in view v, j != i
    blk = [jnp.sum(e[:, v * b:(v + 1) * b], axis=1, keepdims=True)
           for v in range(nv)]

    contrastive = jnp.zeros((1, 1), jnp.float32)
    for va, vb in ((0, 1), (0, 2), (1, 2)):
        lse = m + jnp.log(blk[va] + blk[vb])                   # (3B, 1)
        lse_sum = (_sum_all(lse[va * b:(va + 1) * b])
                   + _sum_all(lse[vb * b:(vb + 1) * b]))
        pos_sum = _sum_all(zs[va] * zs[vb]) * inv_t            # sum of row dots
        contrastive = contrastive + (lse_sum - 2.0 * pos_sum) * (1.0 / float(2 * b))

    # ---- reconstruction (6 pairs; each matrix normalized ONCE) -------------
    fn = center_norm_stack(feats_ref[...].astype(jnp.float32))  # (9, B, Df)
    recon = jnp.zeros((1, 1), jnp.float32)
    for ri, oi in ((3, 0), (4, 0), (5, 1), (6, 1), (7, 2), (8, 2)):
        d = fn[ri] - fn[oi]
        recon = recon + jnp.sqrt(_sum_all(d * d))               # Frobenius norm

    # ---- KL over all clusters / views (forward's compute_kl_gamma) ---------
    prior = prior_ref[...].astype(jnp.float32)                  # (1, Da)
    aq = alphas_ref[...].astype(jnp.float32)                    # (3*K*B, Da)
    lg, dg = _lgamma_digamma(aq)
    kl = prior_term_ref[0, 0] + _sum_all((aq - prior) * dg) - _sum_all(lg)

    out_ref[...] = contrastive + 0.7 * recon + kl


# ----------------------------------------------------------------------------
# Wrapper
# ----------------------------------------------------------------------------
@functools.partial(jax.jit, static_argnames=("inv_temperature",))
def _loss_impl(prior_alpha, ori1, ori2, ori3,
               shared1_rec, shared2_rec, shared3_rec,
               specific1_rec, specific2_rec, specific3_rec,
               shared1_mlp, shared2_mlp, shared3_mlp,
               specific1_alpha, specific2_alpha, specific3_alpha,
               *, inv_temperature):
    f32 = jnp.float32
    d_alpha = prior_alpha.shape[-1]

    # Stack into few, larger refs (cheap XLA copies; far fewer DMA descriptors)
    zs = jnp.stack([shared1_mlp, shared2_mlp, shared3_mlp]).astype(f32)
    feats = jnp.stack([ori1, ori2, ori3,
                       shared1_rec, specific1_rec,
                       shared2_rec, specific2_rec,
                       shared3_rec, specific3_rec]).astype(f32)
    alphas = jnp.concatenate(
        [specific1_alpha.reshape(-1, d_alpha),
         specific2_alpha.reshape(-1, d_alpha),
         specific3_alpha.reshape(-1, d_alpha)], axis=0).astype(f32)
    prior2d = prior_alpha.reshape(1, d_alpha).astype(f32)

    # Data-independent prior term, hoisted out of the kernel (exact lgamma)
    r_total = alphas.shape[0]                                   # 3 * K * B
    prior_term = (float(r_total) * jnp.sum(lax.lgamma(prior2d))).reshape(1, 1)

    kernel = functools.partial(_fused_loss_kernel,
                               inv_temp=float(inv_temperature))
    out = pl.pallas_call(
        kernel,
        out_shape=jax.ShapeDtypeStruct((1, 1), f32),
        in_specs=[
            pl.BlockSpec(memory_space=pltpu.MemorySpace.SMEM),  # prior_term
            pl.BlockSpec(memory_space=pltpu.MemorySpace.VMEM),  # zs
            pl.BlockSpec(memory_space=pltpu.MemorySpace.VMEM),  # feats
            pl.BlockSpec(memory_space=pltpu.MemorySpace.VMEM),  # prior2d
            pl.BlockSpec(memory_space=pltpu.MemorySpace.VMEM),  # alphas
        ],
        out_specs=pl.BlockSpec(memory_space=pltpu.MemorySpace.VMEM),
    )(prior_term, zs, feats, prior2d, alphas)
    return out[0, 0]


def shared_and_specific_loss(params, num_of_clusters):
    (prior_alpha, ori1, ori2, ori3,
     shared1_output, shared2_output, shared3_output,        # unused in forward
     specific1_output, specific2_output, specific3_output,  # unused in forward
     shared1_rec, shared2_rec, shared3_rec,
     specific1_rec, specific2_rec, specific3_rec,
     shared1_mlp, shared2_mlp, shared3_mlp,
     specific1_alpha, specific2_alpha, specific3_alpha,
     temperature, batch_size) = params
    del shared1_output, shared2_output, shared3_output
    del specific1_output, specific2_output, specific3_output
    del batch_size  # implied by shared*_mlp.shape[0]
    assert specific1_alpha.shape[0] == num_of_clusters

    # temperature is a static (concrete) scalar -> 1/temperature constant-folds
    return _loss_impl(prior_alpha, ori1, ori2, ori3,
                      shared1_rec, shared2_rec, shared3_rec,
                      specific1_rec, specific2_rec, specific3_rec,
                      shared1_mlp, shared2_mlp, shared3_mlp,
                      specific1_alpha, specific2_alpha, specific3_alpha,
                      inv_temperature=1.0 / float(temperature))


# ----------------------------------------------------------------------------
# Example run
# ----------------------------------------------------------------------------
if __name__ == "__main__":
    K = 2          # num_of_clusters
    B = 8          # batch_size
    D_MLP = 128    # shared MLP embedding dim
    D_FEAT = 256   # omics feature dim (ori / rec)
    D_ALPHA = 128  # Dirichlet alpha dim

    key = jax.random.PRNGKey(0)
    ks = jax.random.split(key, 24)

    prior_alpha = jax.random.uniform(ks[0], (D_ALPHA,), jnp.float32, 0.5, 1.5)
    ori1 = jax.random.normal(ks[1], (B, D_FEAT), jnp.float32)
    ori2 = jax.random.normal(ks[2], (B, D_FEAT), jnp.float32)
    ori3 = jax.random.normal(ks[3], (B, D_FEAT), jnp.float32)
    shared1_output = jax.random.normal(ks[4], (B, D_MLP), jnp.float32)
    shared2_output = jax.random.normal(ks[5], (B, D_MLP), jnp.float32)
    shared3_output = jax.random.normal(ks[6], (B, D_MLP), jnp.float32)
    specific1_output = jax.random.normal(ks[7], (B, D_MLP), jnp.float32)
    specific2_output = jax.random.normal(ks[8], (B, D_MLP), jnp.float32)
    specific3_output = jax.random.normal(ks[9], (B, D_MLP), jnp.float32)
    shared1_rec = jax.random.normal(ks[10], (B, D_FEAT), jnp.float32)
    shared2_rec = jax.random.normal(ks[11], (B, D_FEAT), jnp.float32)
    shared3_rec = jax.random.normal(ks[12], (B, D_FEAT), jnp.float32)
    specific1_rec = jax.random.normal(ks[13], (B, D_FEAT), jnp.float32)
    specific2_rec = jax.random.normal(ks[14], (B, D_FEAT), jnp.float32)
    specific3_rec = jax.random.normal(ks[15], (B, D_FEAT), jnp.float32)
    shared1_mlp = jax.random.normal(ks[16], (B, D_MLP), jnp.float32)
    shared2_mlp = jax.random.normal(ks[17], (B, D_MLP), jnp.float32)
    shared3_mlp = jax.random.normal(ks[18], (B, D_MLP), jnp.float32)
    specific1_alpha = jax.random.uniform(ks[19], (K, B, D_ALPHA), jnp.float32, 0.5, 2.0)
    specific2_alpha = jax.random.uniform(ks[20], (K, B, D_ALPHA), jnp.float32, 0.5, 2.0)
    specific3_alpha = jax.random.uniform(ks[21], (K, B, D_ALPHA), jnp.float32, 0.5, 2.0)
    temperature = 0.5
    batch_size = B

    params = (prior_alpha, ori1, ori2, ori3,
              shared1_output, shared2_output, shared3_output,
              specific1_output, specific2_output, specific3_output,
              shared1_rec, shared2_rec, shared3_rec,
              specific1_rec, specific2_rec, specific3_rec,
              shared1_mlp, shared2_mlp, shared3_mlp,
              specific1_alpha, specific2_alpha, specific3_alpha,
              temperature, batch_size)

    loss = shared_and_specific_loss(params, num_of_clusters=K)
    loss = jax.block_until_ready(loss)
    assert bool(jnp.isfinite(loss)), f"non-finite loss: {loss}"
    print("KERNEL_OK")
</pallas_src>

<mosaic_0001>
module attributes {stable_mosaic.version = 11 : i64} {
  func.func @_fused_loss_kernel(%arg0: memref<1x1xf32, #tpu.memory_space<smem>>, %arg1: memref<3x8x128xf32, #tpu.memory_space<vmem>>, %arg2: memref<9x8x256xf32, #tpu.memory_space<vmem>>, %arg3: memref<1x128xf32, #tpu.memory_space<vmem>>, %arg4: memref<48x128xf32, #tpu.memory_space<vmem>>, %arg5: memref<1x1xf32, #tpu.memory_space<vmem>>) attributes {dimension_semantics = [], scalar_prefetch = 0 : i64, scratch_operands = 0 : i64, tpu.core_type = #tpu.core_type<tc>} {
    %c0 = arith.constant 0 : index
    %c0_0 = arith.constant 0 : index
    %c0_1 = arith.constant 0 : index
    %0 = vector.load %arg1[%c0, %c0_0, %c0_1] : memref<3x8x128xf32, #tpu.memory_space<vmem>>, vector<3x8x128xf32>
    %cst = arith.constant dense<0.000000e+00> : vector<3x8xf32>
    %1 = vector.multi_reduction <add>, %0, %cst [2] : vector<3x8x128xf32> to vector<3x8xf32>
    %2 = vector.shape_cast %1 : vector<3x8xf32> to vector<3x8x1xf32>
    %cst_2 = arith.constant dense<0.000000e+00> : vector<3x1xf32>
    %3 = vector.multi_reduction <add>, %2, %cst_2 [1] : vector<3x8x1xf32> to vector<3x1xf32>
    %4 = vector.shape_cast %3 : vector<3x1xf32> to vector<3x1x1xf32>
    %cst_3 = arith.constant 9.765625E-4 : f32
    %5 = vector.broadcast %cst_3 : f32 to vector<3x1x1xf32>
    %6 = arith.mulf %4, %5 : vector<3x1x1xf32>
    %7 = vector.broadcast %6 : vector<3x1x1xf32> to vector<3x8x128xf32>
    %8 = arith.subf %0, %7 : vector<3x8x128xf32>
    %9 = arith.mulf %8, %8 : vector<3x8x128xf32>
    %cst_4 = arith.constant dense<0.000000e+00> : vector<3x8xf32>
    %10 = vector.multi_reduction <add>, %9, %cst_4 [2] : vector<3x8x128xf32> to vector<3x8xf32>
    %11 = vector.shape_cast %10 : vector<3x8xf32> to vector<3x8x1xf32>
    %12 = math.sqrt %11 : vector<3x8x1xf32>
    %cst_5 = arith.constant 9.99999996E-13 : f32
    %13 = vector.broadcast %cst_5 : f32 to vector<3x8x1xf32>
    %14 = arith.maximumf %12, %13 : vector<3x8x1xf32>
    %15 = vector.broadcast %14 : vector<3x8x1xf32> to vector<3x8x128xf32>
    %16 = arith.divf %8, %15 : vector<3x8x128xf32>
    %17 = vector.shape_cast %16 : vector<3x8x128xf32> to vector<24x128xf32>
    %cst_6 = arith.constant dense<0.000000e+00> : vector<24x24xf32>
    %18 = tpu.matmul %17, %17, %cst_6 {dimension_numbers = #tpu.dot_dimension_numbers<[1], [1], [0], [0], [0, 0, 1, 0], [], []>} : vector<24x128xf32>, vector<24x128xf32>, vector<24x24xf32> -> vector<24x24xf32>
    %cst_7 = arith.constant 2.000000e+00 : f32
    %19 = vector.broadcast %cst_7 : f32 to vector<24x24xf32>
    %20 = arith.mulf %18, %19 : vector<24x24xf32>
    %21 = tpu.iota {dimensions = array<i32: 0>} : vector<24x24xi32>
    %22 = tpu.iota {dimensions = array<i32: 1>} : vector<24x24xi32>
    %23 = arith.cmpi eq, %21, %22 : vector<24x24xi32>
    %cst_8 = arith.constant -1.000000e+30 : f32
    %24 = vector.broadcast %cst_8 : f32 to vector<24x24xf32>
    %25 = arith.select %23, %24, %20 : vector<24x24xi1>, vector<24x24xf32>
    %cst_9 = arith.constant dense<0xFF800000> : vector<24xf32>
    %26 = vector.multi_reduction <maximumf>, %25, %cst_9 [1] : vector<24x24xf32> to vector<24xf32>
    %27 = vector.shape_cast %26 : vector<24xf32> to vector<24x1xf32>
    %28 = vector.broadcast %27 : vector<24x1xf32> to vector<24x24xf32>
    %29 = arith.subf %25, %28 : vector<24x24xf32>
    %30 = math.exp %29 : vector<24x24xf32>
    %31 = vector.extract_strided_slice %30 {offsets = [0, 0], sizes = [24, 8], strides = [1, 1]} : vector<24x24xf32> to vector<24x8xf32>
    %cst_10 = arith.constant dense<0.000000e+00> : vector<24xf32>
    %32 = vector.multi_reduction <add>, %31, %cst_10 [1] : vector<24x8xf32> to vector<24xf32>
    %33 = vector.shape_cast %32 : vector<24xf32> to vector<24x1xf32>
    %34 = vector.extract_strided_slice %30 {offsets = [0, 8], sizes = [24, 8], strides = [1, 1]} : vector<24x24xf32> to vector<24x8xf32>
    %cst_11 = arith.constant dense<0.000000e+00> : vector<24xf32>
    %35 = vector.multi_reduction <add>, %34, %cst_11 [1] : vector<24x8xf32> to vector<24xf32>
    %36 = vector.shape_cast %35 : vector<24xf32> to vector<24x1xf32>
    %37 = vector.extract_strided_slice %30 {offsets = [0, 16], sizes = [24, 8], strides = [1, 1]} : vector<24x24xf32> to vector<24x8xf32>
    %cst_12 = arith.constant dense<0.000000e+00> : vector<24xf32>
    %38 = vector.multi_reduction <add>, %37, %cst_12 [1] : vector<24x8xf32> to vector<24xf32>
    %39 = vector.shape_cast %38 : vector<24xf32> to vector<24x1xf32>
    %cst_13 = arith.constant 0.000000e+00 : f32
    %40 = vector.broadcast %cst_13 : f32 to vector<1x1xf32>
    %41 = arith.addf %33, %36 : vector<24x1xf32>
    %42 = math.log %41 : vector<24x1xf32>
    %43 = arith.addf %27, %42 : vector<24x1xf32>
    %44 = vector.extract_strided_slice %43 {offsets = [0, 0], sizes = [8, 1], strides = [1, 1]} : vector<24x1xf32> to vector<8x1xf32>
    %cst_14 = arith.constant dense<0.000000e+00> : vector<8xf32>
    %45 = vector.multi_reduction <add>, %44, %cst_14 [1] : vector<8x1xf32> to vector<8xf32>
    %46 = vector.shape_cast %45 : vector<8xf32> to vector<8x1xf32>
    %cst_15 = arith.constant dense<0.000000e+00> : vector<1xf32>
    %47 = vector.multi_reduction <add>, %46, %cst_15 [0] : vector<8x1xf32> to vector<1xf32>
    %48 = vector.shape_cast %47 : vector<1xf32> to vector<1x1xf32>
    %49 = vector.extract_strided_slice %43 {offsets = [8, 0], sizes = [8, 1], strides = [1, 1]} : vector<24x1xf32> to vector<8x1xf32>
    %cst_16 = arith.constant dense<0.000000e+00> : vector<8xf32>
    %50 = vector.multi_reduction <add>, %49, %cst_16 [1] : vector<8x1xf32> to vector<8xf32>
    %51 = vector.shape_cast %50 : vector<8xf32> to vector<8x1xf32>
    %cst_17 = arith.constant dense<0.000000e+00> : vector<1xf32>
    %52 = vector.multi_reduction <add>, %51, %cst_17 [0] : vector<8x1xf32> to vector<1xf32>
    %53 = vector.shape_cast %52 : vector<1xf32> to vector<1x1xf32>
    %54 = arith.addf %48, %53 : vector<1x1xf32>
    %55 = vector.extract_strided_slice %16 {offsets = [0, 0, 0], sizes = [1, 8, 128], strides = [1, 1, 1]} : vector<3x8x128xf32> to vector<1x8x128xf32>
    %56 = vector.shape_cast %55 : vector<1x8x128xf32> to vector<8x128xf32>
    %57 = vector.extract_strided_slice %16 {offsets = [1, 0, 0], sizes = [1, 8, 128], strides = [1, 1, 1]} : vector<3x8x128xf32> to vector<1x8x128xf32>
    %58 = vector.shape_cast %57 : vector<1x8x128xf32> to vector<8x128xf32>
    %59 = arith.mulf %56, %58 : vector<8x128xf32>
    %cst_18 = arith.constant dense<0.000000e+00> : vector<8xf32>
    %60 = vector.multi_reduction <add>, %59, %cst_18 [1] : vector<8x128xf32> to vector<8xf32>
    %61 = vector.shape_cast %60 : vector<8xf32> to vector<8x1xf32>
    %cst_19 = arith.constant dense<0.000000e+00> : vector<1xf32>
    %62 = vector.multi_reduction <add>, %61, %cst_19 [0] : vector<8x1xf32> to vector<1xf32>
    %63 = vector.shape_cast %62 : vector<1xf32> to vector<1x1xf32>
    %cst_20 = arith.constant 2.000000e+00 : f32
    %64 = vector.broadcast %cst_20 : f32 to vector<1x1xf32>
    %65 = arith.mulf %63, %64 : vector<1x1xf32>
    %cst_21 = arith.constant 2.000000e+00 : f32
    %66 = vector.broadcast %cst_21 : f32 to vector<1x1xf32>
    %67 = arith.mulf %66, %65 : vector<1x1xf32>
    %68 = arith.subf %54, %67 : vector<1x1xf32>
    %cst_22 = arith.constant 6.250000e-02 : f32
    %69 = vector.broadcast %cst_22 : f32 to vector<1x1xf32>
    %70 = arith.mulf %68, %69 : vector<1x1xf32>
    %71 = arith.addf %40, %70 : vector<1x1xf32>
    %72 = arith.addf %33, %39 : vector<24x1xf32>
    %73 = math.log %72 : vector<24x1xf32>
    %74 = arith.addf %27, %73 : vector<24x1xf32>
    %75 = vector.extract_strided_slice %74 {offsets = [0, 0], sizes = [8, 1], strides = [1, 1]} : vector<24x1xf32> to vector<8x1xf32>
    %cst_23 = arith.constant dense<0.000000e+00> : vector<8xf32>
    %76 = vector.multi_reduction <add>, %75, %cst_23 [1] : vector<8x1xf32> to vector<8xf32>
    %77 = vector.shape_cast %76 : vector<8xf32> to vector<8x1xf32>
    %cst_24 = arith.constant dense<0.000000e+00> : vector<1xf32>
    %78 = vector.multi_reduction <add>, %77, %cst_24 [0] : vector<8x1xf32> to vector<1xf32>
    %79 = vector.shape_cast %78 : vector<1xf32> to vector<1x1xf32>
    %80 = vector.extract_strided_slice %74 {offsets = [16, 0], sizes = [8, 1], strides = [1, 1]} : vector<24x1xf32> to vector<8x1xf32>
    %cst_25 = arith.constant dense<0.000000e+00> : vector<8xf32>
    %81 = vector.multi_reduction <add>, %80, %cst_25 [1] : vector<8x1xf32> to vector<8xf32>
    %82 = vector.shape_cast %81 : vector<8xf32> to vector<8x1xf32>
    %cst_26 = arith.constant dense<0.000000e+00> : vector<1xf32>
    %83 = vector.multi_reduction <add>, %82, %cst_26 [0] : vector<8x1xf32> to vector<1xf32>
    %84 = vector.shape_cast %83 : vector<1xf32> to vector<1x1xf32>
    %85 = arith.addf %79, %84 : vector<1x1xf32>
    %86 = vector.extract_strided_slice %16 {offsets = [0, 0, 0], sizes = [1, 8, 128], strides = [1, 1, 1]} : vector<3x8x128xf32> to vector<1x8x128xf32>
    %87 = vector.shape_cast %86 : vector<1x8x128xf32> to vector<8x128xf32>
    %88 = vector.extract_strided_slice %16 {offsets = [2, 0, 0], sizes = [1, 8, 128], strides = [1, 1, 1]} : vector<3x8x128xf32> to vector<1x8x128xf32>
    %89 = vector.shape_cast %88 : vector<1x8x128xf32> to vector<8x128xf32>
    %90 = arith.mulf %87, %89 : vector<8x128xf32>
    %cst_27 = arith.constant dense<0.000000e+00> : vector<8xf32>
    %91 = vector.multi_reduction <add>, %90, %cst_27 [1] : vector<8x128xf32> to vector<8xf32>
    %92 = vector.shape_cast %91 : vector<8xf32> to vector<8x1xf32>
    %cst_28 = arith.constant dense<0.000000e+00> : vector<1xf32>
    %93 = vector.multi_reduction <add>, %92, %cst_28 [0] : vector<8x1xf32> to vector<1xf32>
    %94 = vector.shape_cast %93 : vector<1xf32> to vector<1x1xf32>
    %cst_29 = arith.constant 2.000000e+00 : f32
    %95 = vector.broadcast %cst_29 : f32 to vector<1x1xf32>
    %96 = arith.mulf %94, %95 : vector<1x1xf32>
    %cst_30 = arith.constant 2.000000e+00 : f32
    %97 = vector.broadcast %cst_30 : f32 to vector<1x1xf32>
    %98 = arith.mulf %97, %96 : vector<1x1xf32>
    %99 = arith.subf %85, %98 : vector<1x1xf32>
    %cst_31 = arith.constant 6.250000e-02 : f32
    %100 = vector.broadcast %cst_31 : f32 to vector<1x1xf32>
    %101 = arith.mulf %99, %100 : vector<1x1xf32>
    %102 = arith.addf %71, %101 : vector<1x1xf32>
    %103 = arith.addf %36, %39 : vector<24x1xf32>
    %104 = math.log %103 : vector<24x1xf32>
    %105 = arith.addf %27, %104 : vector<24x1xf32>
    %106 = vector.extract_strided_slice %105 {offsets = [8, 0], sizes = [8, 1], strides = [1, 1]} : vector<24x1xf32> to vector<8x1xf32>
    %cst_32 = arith.constant dense<0.000000e+00> : vector<8xf32>
    %107 = vector.multi_reduction <add>, %106, %cst_32 [1] : vector<8x1xf32> to vector<8xf32>
    %108 = vector.shape_cast %107 : vector<8xf32> to vector<8x1xf32>
    %cst_33 = arith.constant dense<0.000000e+00> : vector<1xf32>
    %109 = vector.multi_reduction <add>, %108, %cst_33 [0] : vector<8x1xf32> to vector<1xf32>
    %110 = vector.shape_cast %109 : vector<1xf32> to vector<1x1xf32>
    %111 = vector.extract_strided_slice %105 {offsets = [16, 0], sizes = [8, 1], strides = [1, 1]} : vector<24x1xf32> to vector<8x1xf32>
    %cst_34 = arith.constant dense<0.000000e+00> : vector<8xf32>
    %112 = vector.multi_reduction <add>, %111, %cst_34 [1] : vector<8x1xf32> to vector<8xf32>
    %113 = vector.shape_cast %112 : vector<8xf32> to vector<8x1xf32>
    %cst_35 = arith.constant dense<0.000000e+00> : vector<1xf32>
    %114 = vector.multi_reduction <add>, %113, %cst_35 [0] : vector<8x1xf32> to vector<1xf32>
    %115 = vector.shape_cast %114 : vector<1xf32> to vector<1x1xf32>
    %116 = arith.addf %110, %115 : vector<1x1xf32>
    %117 = vector.extract_strided_slice %16 {offsets = [1, 0, 0], sizes = [1, 8, 128], strides = [1, 1, 1]} : vector<3x8x128xf32> to vector<1x8x128xf32>
    %118 = vector.shape_cast %117 : vector<1x8x128xf32> to vector<8x128xf32>
    %119 = vector.extract_strided_slice %16 {offsets = [2, 0, 0], sizes = [1, 8, 128], strides = [1, 1, 1]} : vector<3x8x128xf32> to vector<1x8x128xf32>
    %120 = vector.shape_cast %119 : vector<1x8x128xf32> to vector<8x128xf32>
    %121 = arith.mulf %118, %120 : vector<8x128xf32>
    %cst_36 = arith.constant dense<0.000000e+00> : vector<8xf32>
    %122 = vector.multi_reduction <add>, %121, %cst_36 [1] : vector<8x128xf32> to vector<8xf32>
    %123 = vector.shape_cast %122 : vector<8xf32> to vector<8x1xf32>
    %cst_37 = arith.constant dense<0.000000e+00> : vector<1xf32>
    %124 = vector.multi_reduction <add>, %123, %cst_37 [0] : vector<8x1xf32> to vector<1xf32>
    %125 = vector.shape_cast %124 : vector<1xf32> to vector<1x1xf32>
    %cst_38 = arith.constant 2.000000e+00 : f32
    %126 = vector.broadcast %cst_38 : f32 to vector<1x1xf32>
    %127 = arith.mulf %125, %126 : vector<1x1xf32>
    %cst_39 = arith.constant 2.000000e+00 : f32
    %128 = vector.broadcast %cst_39 : f32 to vector<1x1xf32>
    %129 = arith.mulf %128, %127 : vector<1x1xf32>
    %130 = arith.subf %116, %129 : vector<1x1xf32>
    %cst_40 = arith.constant 6.250000e-02 : f32
    %131 = vector.broadcast %cst_40 : f32 to vector<1x1xf32>
    %132 = arith.mulf %130, %131 : vector<1x1xf32>
    %133 = arith.addf %102, %132 : vector<1x1xf32>
    %c0_41 = arith.constant 0 : index
    %c0_42 = arith.constant 0 : index
    %c0_43 = arith.constant 0 : index
    %134 = vector.load %arg2[%c0_41, %c0_42, %c0_43] : memref<9x8x256xf32, #tpu.memory_space<vmem>>, vector<9x8x256xf32>
    %cst_44 = arith.constant dense<0.000000e+00> : vector<9x8xf32>
    %135 = vector.multi_reduction <add>, %134, %cst_44 [2] : vector<9x8x256xf32> to vector<9x8xf32>
    %136 = vector.shape_cast %135 : vector<9x8xf32> to vector<9x8x1xf32>
    %cst_45 = arith.constant dense<0.000000e+00> : vector<9x1xf32>
    %137 = vector.multi_reduction <add>, %136, %cst_45 [1] : vector<9x8x1xf32> to vector<9x1xf32>
    %138 = vector.shape_cast %137 : vector<9x1xf32> to vector<9x1x1xf32>
    %cst_46 = arith.constant 4.8828125E-4 : f32
    %139 = vector.broadcast %cst_46 : f32 to vector<9x1x1xf32>
    %140 = arith.mulf %138, %139 : vector<9x1x1xf32>
    %141 = vector.broadcast %140 : vector<9x1x1xf32> to vector<9x8x256xf32>
    %142 = arith.subf %134, %141 : vector<9x8x256xf32>
    %143 = arith.mulf %142, %142 : vector<9x8x256xf32>
    %cst_47 = arith.constant dense<0.000000e+00> : vector<9x8xf32>
    %144 = vector.multi_reduction <add>, %143, %cst_47 [2] : vector<9x8x256xf32> to vector<9x8xf32>
    %145 = vector.shape_cast %144 : vector<9x8xf32> to vector<9x8x1xf32>
    %146 = math.sqrt %145 : vector<9x8x1xf32>
    %cst_48 = arith.constant 9.99999996E-13 : f32
    %147 = vector.broadcast %cst_48 : f32 to vector<9x8x1xf32>
    %148 = arith.maximumf %146, %147 : vector<9x8x1xf32>
    %149 = vector.broadcast %148 : vector<9x8x1xf32> to vector<9x8x256xf32>
    %150 = arith.divf %142, %149 : vector<9x8x256xf32>
    %cst_49 = arith.constant 0.000000e+00 : f32
    %151 = vector.broadcast %cst_49 : f32 to vector<1x1xf32>
    %152 = vector.extract_strided_slice %150 {offsets = [3, 0, 0], sizes = [1, 8, 256], strides = [1, 1, 1]} : vector<9x8x256xf32> to vector<1x8x256xf32>
    %153 = vector.shape_cast %152 : vector<1x8x256xf32> to vector<8x256xf32>
    %154 = vector.extract_strided_slice %150 {offsets = [0, 0, 0], sizes = [1, 8, 256], strides = [1, 1, 1]} : vector<9x8x256xf32> to vector<1x8x256xf32>
    %155 = vector.shape_cast %154 : vector<1x8x256xf32> to vector<8x256xf32>
    %156 = arith.subf %153, %155 : vector<8x256xf32>
    %157 = arith.mulf %156, %156 : vector<8x256xf32>
    %cst_50 = arith.constant dense<0.000000e+00> : vector<8xf32>
    %158 = vector.multi_reduction <add>, %157, %cst_50 [1] : vector<8x256xf32> to vector<8xf32>
    %159 = vector.shape_cast %158 : vector<8xf32> to vector<8x1xf32>
    %cst_51 = arith.constant dense<0.000000e+00> : vector<1xf32>
    %160 = vector.multi_reduction <add>, %159, %cst_51 [0] : vector<8x1xf32> to vector<1xf32>
    %161 = vector.shape_cast %160 : vector<1xf32> to vector<1x1xf32>
    %162 = math.sqrt %161 : vector<1x1xf32>
    %163 = arith.addf %151, %162 : vector<1x1xf32>
    %164 = vector.extract_strided_slice %150 {offsets = [4, 0, 0], sizes = [1, 8, 256], strides = [1, 1, 1]} : vector<9x8x256xf32> to vector<1x8x256xf32>
    %165 = vector.shape_cast %164 : vector<1x8x256xf32> to vector<8x256xf32>
    %166 = vector.extract_strided_slice %150 {offsets = [0, 0, 0], sizes = [1, 8, 256], strides = [1, 1, 1]} : vector<9x8x256xf32> to vector<1x8x256xf32>
    %167 = vector.shape_cast %166 : vector<1x8x256xf32> to vector<8x256xf32>
    %168 = arith.subf %165, %167 : vector<8x256xf32>
    %169 = arith.mulf %168, %168 : vector<8x256xf32>
    %cst_52 = arith.constant dense<0.000000e+00> : vector<8xf32>
    %170 = vector.multi_reduction <add>, %169, %cst_52 [1] : vector<8x256xf32> to vector<8xf32>
    %171 = vector.shape_cast %170 : vector<8xf32> to vector<8x1xf32>
    %cst_53 = arith.constant dense<0.000000e+00> : vector<1xf32>
    %172 = vector.multi_reduction <add>, %171, %cst_53 [0] : vector<8x1xf32> to vector<1xf32>
    %173 = vector.shape_cast %172 : vector<1xf32> to vector<1x1xf32>
    %174 = math.sqrt %173 : vector<1x1xf32>
    %175 = arith.addf %163, %174 : vector<1x1xf32>
    %176 = vector.extract_strided_slice %150 {offsets = [5, 0, 0], sizes = [1, 8, 256], strides = [1, 1, 1]} : vector<9x8x256xf32> to vector<1x8x256xf32>
    %177 = vector.shape_cast %176 : vector<1x8x256xf32> to vector<8x256xf32>
    %178 = vector.extract_strided_slice %150 {offsets = [1, 0, 0], sizes = [1, 8, 256], strides = [1, 1, 1]} : vector<9x8x256xf32> to vector<1x8x256xf32>
    %179 = vector.shape_cast %178 : vector<1x8x256xf32> to vector<8x256xf32>
    %180 = arith.subf %177, %179 : vector<8x256xf32>
    %181 = arith.mulf %180, %180 : vector<8x256xf32>
    %cst_54 = arith.constant dense<0.000000e+00> : vector<8xf32>
    %182 = vector.multi_reduction <add>, %181, %cst_54 [1] : vector<8x256xf32> to vector<8xf32>
    %183 = vector.shape_cast %182 : vector<8xf32> to vector<8x1xf32>
    %cst_55 = arith.constant dense<0.000000e+00> : vector<1xf32>
    %184 = vector.multi_reduction <add>, %183, %cst_55 [0] : vector<8x1xf32> to vector<1xf32>
    %185 = vector.shape_cast %184 : vector<1xf32> to vector<1x1xf32>
    %186 = math.sqrt %185 : vector<1x1xf32>
    %187 = arith.addf %175, %186 : vector<1x1xf32>
    %188 = vector.extract_strided_slice %150 {offsets = [6, 0, 0], sizes = [1, 8, 256], strides = [1, 1, 1]} : vector<9x8x256xf32> to vector<1x8x256xf32>
    %189 = vector.shape_cast %188 : vector<1x8x256xf32> to vector<8x256xf32>
    %190 = vector.extract_strided_slice %150 {offsets = [1, 0, 0], sizes = [1, 8, 256], strides = [1, 1, 1]} : vector<9x8x256xf32> to vector<1x8x256xf32>
    %191 = vector.shape_cast %190 : vector<1x8x256xf32> to vector<8x256xf32>
    %192 = arith.subf %189, %191 : vector<8x256xf32>
    %193 = arith.mulf %192, %192 : vector<8x256xf32>
    %cst_56 = arith.constant dense<0.000000e+00> : vector<8xf32>
    %194 = vector.multi_reduction <add>, %193, %cst_56 [1] : vector<8x256xf32> to vector<8xf32>
    %195 = vector.shape_cast %194 : vector<8xf32> to vector<8x1xf32>
    %cst_57 = arith.constant dense<0.000000e+00> : vector<1xf32>
    %196 = vector.multi_reduction <add>, %195, %cst_57 [0] : vector<8x1xf32> to vector<1xf32>
    %197 = vector.shape_cast %196 : vector<1xf32> to vector<1x1xf32>
    %198 = math.sqrt %197 : vector<1x1xf32>
    %199 = arith.addf %187, %198 : vector<1x1xf32>
    %200 = vector.extract_strided_slice %150 {offsets = [7, 0, 0], sizes = [1, 8, 256], strides = [1, 1, 1]} : vector<9x8x256xf32> to vector<1x8x256xf32>
    %201 = vector.shape_cast %200 : vector<1x8x256xf32> to vector<8x256xf32>
    %202 = vector.extract_strided_slice %150 {offsets = [2, 0, 0], sizes = [1, 8, 256], strides = [1, 1, 1]} : vector<9x8x256xf32> to vector<1x8x256xf32>
    %203 = vector.shape_cast %202 : vector<1x8x256xf32> to vector<8x256xf32>
    %204 = arith.subf %201, %203 : vector<8x256xf32>
    %205 = arith.mulf %204, %204 : vector<8x256xf32>
    %cst_58 = arith.constant dense<0.000000e+00> : vector<8xf32>
    %206 = vector.multi_reduction <add>, %205, %cst_58 [1] : vector<8x256xf32> to vector<8xf32>
    %207 = vector.shape_cast %206 : vector<8xf32> to vector<8x1xf32>
    %cst_59 = arith.constant dense<0.000000e+00> : vector<1xf32>
    %208 = vector.multi_reduction <add>, %207, %cst_59 [0] : vector<8x1xf32> to vector<1xf32>
    %209 = vector.shape_cast %208 : vector<1xf32> to vector<1x1xf32>
    %210 = math.sqrt %209 : vector<1x1xf32>
    %211 = arith.addf %199, %210 : vector<1x1xf32>
    %212 = vector.extract_strided_slice %150 {offsets = [8, 0, 0], sizes = [1, 8, 256], strides = [1, 1, 1]} : vector<9x8x256xf32> to vector<1x8x256xf32>
    %213 = vector.shape_cast %212 : vector<1x8x256xf32> to vector<8x256xf32>
    %214 = vector.extract_strided_slice %150 {offsets = [2, 0, 0], sizes = [1, 8, 256], strides = [1, 1, 1]} : vector<9x8x256xf32> to vector<1x8x256xf32>
    %215 = vector.shape_cast %214 : vector<1x8x256xf32> to vector<8x256xf32>
    %216 = arith.subf %213, %215 : vector<8x256xf32>
    %217 = arith.mulf %216, %216 : vector<8x256xf32>
    %cst_60 = arith.constant dense<0.000000e+00> : vector<8xf32>
    %218 = vector.multi_reduction <add>, %217, %cst_60 [1] : vector<8x256xf32> to vector<8xf32>
    %219 = vector.shape_cast %218 : vector<8xf32> to vector<8x1xf32>
    %cst_61 = arith.constant dense<0.000000e+00> : vector<1xf32>
    %220 = vector.multi_reduction <add>, %219, %cst_61 [0] : vector<8x1xf32> to vector<1xf32>
    %221 = vector.shape_cast %220 : vector<1xf32> to vector<1x1xf32>
    %222 = math.sqrt %221 : vector<1x1xf32>
    %223 = arith.addf %211, %222 : vector<1x1xf32>
    %c0_62 = arith.constant 0 : index
    %c0_63 = arith.constant 0 : index
    %224 = vector.load %arg3[%c0_62, %c0_63] : memref<1x128xf32, #tpu.memory_space<vmem>>, vector<1x128xf32>
    %c0_64 = arith.constant 0 : index
    %c0_65 = arith.constant 0 : index
    %225 = vector.load %arg4[%c0_64, %c0_65] : memref<48x128xf32, #tpu.memory_space<vmem>>, vector<48x128xf32>
    %cst_66 = arith.constant 0.000000e+00 : f32
    %226 = vector.broadcast %cst_66 : f32 to vector<48x128xf32>
    %227 = arith.addf %225, %226 : vector<48x128xf32>
    %cst_67 = arith.constant 1.000000e+00 : f32
    %228 = vector.broadcast %cst_67 : f32 to vector<48x128xf32>
    %229 = arith.divf %228, %227 : vector<48x128xf32>
    %cst_68 = arith.constant 1.000000e+00 : f32
    %230 = vector.broadcast %cst_68 : f32 to vector<48x128xf32>
    %231 = arith.addf %225, %230 : vector<48x128xf32>
    %cst_69 = arith.constant 1.000000e+00 : f32
    %232 = vector.broadcast %cst_69 : f32 to vector<48x128xf32>
    %233 = arith.divf %232, %231 : vector<48x128xf32>
    %cst_70 = arith.constant 2.000000e+00 : f32
    %234 = vector.broadcast %cst_70 : f32 to vector<48x128xf32>
    %235 = arith.addf %225, %234 : vector<48x128xf32>
    %cst_71 = arith.constant 1.000000e+00 : f32
    %236 = vector.broadcast %cst_71 : f32 to vector<48x128xf32>
    %237 = arith.divf %236, %235 : vector<48x128xf32>
    %cst_72 = arith.constant 3.000000e+00 : f32
    %238 = vector.broadcast %cst_72 : f32 to vector<48x128xf32>
    %239 = arith.addf %225, %238 : vector<48x128xf32>
    %cst_73 = arith.constant 1.000000e+00 : f32
    %240 = vector.broadcast %cst_73 : f32 to vector<48x128xf32>
    %241 = arith.divf %240, %239 : vector<48x128xf32>
    %cst_74 = arith.constant 4.000000e+00 : f32
    %242 = vector.broadcast %cst_74 : f32 to vector<48x128xf32>
    %243 = arith.addf %225, %242 : vector<48x128xf32>
    %cst_75 = arith.constant 1.000000e+00 : f32
    %244 = vector.broadcast %cst_75 : f32 to vector<48x128xf32>
    %245 = arith.divf %244, %243 : vector<48x128xf32>
    %cst_76 = arith.constant 5.000000e+00 : f32
    %246 = vector.broadcast %cst_76 : f32 to vector<48x128xf32>
    %247 = arith.addf %225, %246 : vector<48x128xf32>
    %cst_77 = arith.constant 1.000000e+00 : f32
    %248 = vector.broadcast %cst_77 : f32 to vector<48x128xf32>
    %249 = arith.divf %248, %247 : vector<48x128xf32>
    %cst_78 = arith.constant 6.000000e+00 : f32
    %250 = vector.broadcast %cst_78 : f32 to vector<48x128xf32>
    %251 = arith.addf %225, %250 : vector<48x128xf32>
    %cst_79 = arith.constant 1.000000e+00 : f32
    %252 = vector.broadcast %cst_79 : f32 to vector<48x128xf32>
    %253 = arith.divf %252, %251 : vector<48x128xf32>
    %cst_80 = arith.constant 7.000000e+00 : f32
    %254 = vector.broadcast %cst_80 : f32 to vector<48x128xf32>
    %255 = arith.addf %225, %254 : vector<48x128xf32>
    %cst_81 = arith.constant 1.000000e+00 : f32
    %256 = vector.broadcast %cst_81 : f32 to vector<48x128xf32>
    %257 = arith.divf %256, %255 : vector<48x128xf32>
    %cst_82 = arith.constant 1.000000e+00 : f32
    %258 = vector.broadcast %cst_82 : f32 to vector<48x128xf32>
    %cst_83 = arith.constant 676.520386 : f32
    %259 = vector.broadcast %cst_83 : f32 to vector<48x128xf32>
    %260 = arith.mulf %259, %229 : vector<48x128xf32>
    %261 = arith.addf %258, %260 : vector<48x128xf32>
    %cst_84 = arith.constant -1259.13916 : f32
    %262 = vector.broadcast %cst_84 : f32 to vector<48x128xf32>
    %263 = arith.mulf %262, %233 : vector<48x128xf32>
    %264 = arith.addf %261, %263 : vector<48x128xf32>
    %cst_85 = arith.constant 771.323425 : f32
    %265 = vector.broadcast %cst_85 : f32 to vector<48x128xf32>
    %266 = arith.mulf %265, %237 : vector<48x128xf32>
    %267 = arith.addf %264, %266 : vector<48x128xf32>
    %cst_86 = arith.constant -176.615036 : f32
    %268 = vector.broadcast %cst_86 : f32 to vector<48x128xf32>
    %269 = arith.mulf %268, %241 : vector<48x128xf32>
    %270 = arith.addf %267, %269 : vector<48x128xf32>
    %cst_87 = arith.constant 12.5073433 : f32
    %271 = vector.broadcast %cst_87 : f32 to vector<48x128xf32>
    %272 = arith.mulf %271, %245 : vector<48x128xf32>
    %273 = arith.addf %270, %272 : vector<48x128xf32>
    %cst_88 = arith.constant -0.138571098 : f32
    %274 = vector.broadcast %cst_88 : f32 to vector<48x128xf32>
    %275 = arith.mulf %274, %249 : vector<48x128xf32>
    %276 = arith.addf %273, %275 : vector<48x128xf32>
    %cst_89 = arith.constant 9.98436917E-6 : f32
    %277 = vector.broadcast %cst_89 : f32 to vector<48x128xf32>
    %278 = arith.mulf %277, %253 : vector<48x128xf32>
    %279 = arith.addf %276, %278 : vector<48x128xf32>
    %cst_90 = arith.constant 1.50563267E-7 : f32
    %280 = vector.broadcast %cst_90 : f32 to vector<48x128xf32>
    %281 = arith.mulf %280, %257 : vector<48x128xf32>
    %282 = arith.addf %279, %281 : vector<48x128xf32>
    %cst_91 = arith.constant 6.500000e+00 : f32
    %283 = vector.broadcast %cst_91 : f32 to vector<48x128xf32>
    %284 = arith.addf %225, %283 : vector<48x128xf32>
    %cst_92 = arith.constant 5.000000e-01 : f32
    %285 = vector.broadcast %cst_92 : f32 to vector<48x128xf32>
    %286 = arith.subf %225, %285 : vector<48x128xf32>
    %287 = math.log %284 : vector<48x128xf32>
    %288 = arith.mulf %286, %287 : vector<48x128xf32>
    %cst_93 = arith.constant 0.918938517 : f32
    %289 = vector.broadcast %cst_93 : f32 to vector<48x128xf32>
    %290 = arith.addf %289, %288 : vector<48x128xf32>
    %291 = arith.subf %290, %284 : vector<48x128xf32>
    %292 = math.log %282 : vector<48x128xf32>
    %293 = arith.addf %291, %292 : vector<48x128xf32>
    %294 = arith.addf %229, %233 : vector<48x128xf32>
    %295 = arith.addf %294, %237 : vector<48x128xf32>
    %296 = arith.addf %295, %241 : vector<48x128xf32>
    %297 = arith.addf %296, %245 : vector<48x128xf32>
    %298 = arith.addf %297, %249 : vector<48x128xf32>
    %299 = arith.addf %298, %253 : vector<48x128xf32>
    %cst_94 = arith.constant 7.000000e+00 : f32
    %300 = vector.broadcast %cst_94 : f32 to vector<48x128xf32>
    %301 = arith.addf %225, %300 : vector<48x128xf32>
    %302 = arith.mulf %257, %257 : vector<48x128xf32>
    %303 = math.log %301 : vector<48x128xf32>
    %cst_95 = arith.constant 5.000000e-01 : f32
    %304 = vector.broadcast %cst_95 : f32 to vector<48x128xf32>
    %305 = arith.mulf %304, %257 : vector<48x128xf32>
    %306 = arith.subf %303, %305 : vector<48x128xf32>
    %cst_96 = arith.constant 2.520000e+02 : f32
    %307 = vector.broadcast %cst_96 : f32 to vector<48x128xf32>
    %308 = arith.divf %302, %307 : vector<48x128xf32>
    %cst_97 = arith.constant 0.00833333377 : f32
    %309 = vector.broadcast %cst_97 : f32 to vector<48x128xf32>
    %310 = arith.subf %309, %308 : vector<48x128xf32>
    %311 = arith.mulf %302, %310 : vector<48x128xf32>
    %cst_98 = arith.constant 0.0833333358 : f32
    %312 = vector.broadcast %cst_98 : f32 to vector<48x128xf32>
    %313 = arith.subf %312, %311 : vector<48x128xf32>
    %314 = arith.mulf %302, %313 : vector<48x128xf32>
    %315 = arith.subf %306, %314 : vector<48x128xf32>
    %316 = arith.subf %315, %299 : vector<48x128xf32>
    %c0_99 = arith.constant 0 : index
    %c0_100 = arith.constant 0 : index
    %317 = memref.load %arg0[%c0_99, %c0_100] : memref<1x1xf32, #tpu.memory_space<smem>>
    %318 = vector.broadcast %224 : vector<1x128xf32> to vector<48x128xf32>
    %319 = arith.subf %225, %318 : vector<48x128xf32>
    %320 = arith.mulf %319, %316 : vector<48x128xf32>
    %cst_101 = arith.constant dense<0.000000e+00> : vector<48xf32>
    %321 = vector.multi_reduction <add>, %320, %cst_101 [1] : vector<48x128xf32> to vector<48xf32>
    %322 = vector.shape_cast %321 : vector<48xf32> to vector<48x1xf32>
    %cst_102 = arith.constant dense<0.000000e+00> : vector<1xf32>
    %323 = vector.multi_reduction <add>, %322, %cst_102 [0] : vector<48x1xf32> to vector<1xf32>
    %324 = vector.shape_cast %323 : vector<1xf32> to vector<1x1xf32>
    %325 = vector.broadcast %317 : f32 to vector<1x1xf32>
    %326 = arith.addf %325, %324 : vector<1x1xf32>
    %cst_103 = arith.constant dense<0.000000e+00> : vector<48xf32>
    %327 = vector.multi_reduction <add>, %293, %cst_103 [1] : vector<48x128xf32> to vector<48xf32>
    %328 = vector.shape_cast %327 : vector<48xf32> to vector<48x1xf32>
    %cst_104 = arith.constant dense<0.000000e+00> : vector<1xf32>
    %329 = vector.multi_reduction <add>, %328, %cst_104 [0] : vector<48x1xf32> to vector<1xf32>
    %330 = vector.shape_cast %329 : vector<1xf32> to vector<1x1xf32>
    %331 = arith.subf %326, %330 : vector<1x1xf32>
    %cst_105 = arith.constant 0.699999988 : f32
    %332 = vector.broadcast %cst_105 : f32 to vector<1x1xf32>
    %333 = arith.mulf %332, %223 : vector<1x1xf32>
    %334 = arith.addf %133, %333 : vector<1x1xf32>
    %335 = arith.addf %334, %331 : vector<1x1xf32>
    %c0_106 = arith.constant 0 : index
    %c0_107 = arith.constant 0 : index
    %336 = vector.load %arg5[%c0_106, %c0_107] : memref<1x1xf32, #tpu.memory_space<vmem>>, vector<1x1xf32>
    tpu.vector_store %arg5[%c0_106, %c0_107], %335 {strides = array<i32>} : memref<1x1xf32, #tpu.memory_space<vmem>>, vector<1x1xf32>,
    return
  }
}

</mosaic_0001>

<llo_original>
// kernel: _loss_impl.1
$region0: #{_loss_impl.1}
  #allocation0 [shape = 'u32[]', space=smem, size = 0x4, offset = 0x4, fixed_abs, tag = 'smem constant byte address 0x4 - core index']
  #allocation1 [shape = 'u32[144,128]{1,0:T(1,128)}', space=vmem, size = 0x12000, scoped, tag = 'internal scratch']
  #allocation2 [shape = 'f32[1,1]{1,0:T(1,128)S(6)}', space=smem, size = 0x200, scoped, tag = 'scoped memory for _loss_impl.1']
  %s0 = inlined_call_operand.<no memory space> [shape: f32[1,1], index: 0, kind: input, shape index: {}]
  %s1 = inlined_call_operand.vmem [shape: f32[3,8,128], index: 1, kind: input, shape index: {}]
  %s2 = inlined_call_operand.vmem [shape: f32[9,8,256], index: 2, kind: input, shape index: {}]
  %s3 = inlined_call_operand.vmem [shape: f32[1,128], index: 3, kind: input, shape index: {}]
  %s4 = inlined_call_operand.vmem [shape: f32[48,128], index: 4, kind: input, shape index: {}]
  %s5 = inlined_call_operand.hbm [shape: f32[1,1], index: 5, kind: output, shape index: {}]
  %s6 = sld [smem:[#allocation0]]
  $region30: #{_loss_impl.1} parent=0
    _
  %s8 = ssub.s32 1, %s6
  %s9 = scalar_select 0, %s8, %s6
  %10 = sst [smem:[#allocation2]] %s0
  $region1: #{_loss_impl.1} parent=0
    #allocation3 [shape = 'u8[512]{0}', space=vmem, size = 0x400, scoped, tag = 'output window, operand 0, single buffered']
    #allocation4 [shape = 's32[1]{0}', space=sflag, size = 0x4, scoped, tag = 'scoped memory for _loss_impl.1']
    %11 = vsyncpa [#allocation4], 0
    // Predicated region
    $region2: #{_loss_impl.1} parent=1 // pred_check
      _
    $region3: #{_loss_impl.1} parent=1 // pred_check_branch
      %13 = sbr.rel (0) target = $region5
    $region4: #{_loss_impl.1} parent=1 // pred_region
      _
    $region5: #{_loss_impl.1} parent=1 // pred_fallthru
      _
    // Predicated region
    $region6: #{_loss_impl.1} parent=1 // pred_check
      _
    $region7: #{_loss_impl.1} parent=1 // pred_check_branch
      %15 = sbr.rel (0) target = $region9
    $region8: #{_loss_impl.1} parent=1 // pred_region
      _
    $region9: #{_loss_impl.1} parent=1 // pred_fallthru
      _
    // Predicated region
    $region10: #{_loss_impl.1} parent=1 // pred_check
      _
    $region11: #{_loss_impl.1} parent=1 // pred_check_branch
      %17 = sbr.rel (0) target = $region13
    $region12: #{_loss_impl.1} parent=1 // pred_region
      _
    $region13: #{_loss_impl.1} parent=1 // pred_fallthru
      _
    // Predicated region
    $region14: #{_loss_impl.1} parent=1 // pred_check
      _
    $region15: #{_loss_impl.1} parent=1 // pred_check_branch
      %19 = sbr.rel (0) target = $region17
    $region16: #{_loss_impl.1} parent=1 // pred_region
      _
    $region17: #{_loss_impl.1} parent=1 // pred_fallthru
      _
    // Predicated region
    $region18: #{_loss_impl.1} parent=1 // pred_check
      _
    $region19: #{_loss_impl.1} parent=1 // pred_check_branch
      %21 = sbr.rel (0) target = $region21
    $region20: #{_loss_impl.1} parent=1 // pred_region
      _
    $region21: #{_loss_impl.1} parent=1 // pred_fallthru
      _
    %v22 = vld [vmem:[%s1] sm:$0xff]
    %v23 = vld [vmem:[%s1 + $0x8] sm:$0xff]
    %v24 = vld [vmem:[%s1 + $0x10] sm:$0xff]
    %25 = vadd.xlane.f32.xlu0 %v22
    %v26 = vpop.xlane.xlu0 %25
    %27 = vadd.xlane.f32.xlu0 %v23
    %v28 = vpop.xlane.xlu0 %27
    %29 = vadd.xlane.f32.xlu0 %v24
    %v30 = vpop.xlane.xlu0 %29
    %v31 = vrot.slane %v26, 4
    %v32 = vadd.f32 %v26, %v31
    %v33 = vrot.slane %v32, 2
    %v34 = vadd.f32 %v32, %v33
    %v35 = vrot.slane %v34, 1
    %v36 = vadd.f32 %v34, %v35
    %v37 = vrot.slane %v28, 4
    %v38 = vadd.f32 %v28, %v37
    %v39 = vrot.slane %v38, 2
    %v40 = vadd.f32 %v38, %v39
    %v41 = vrot.slane %v40, 1
    %v42 = vadd.f32 %v40, %v41
    %v43 = vrot.slane %v30, 4
    %v44 = vadd.f32 %v30, %v43
    %v45 = vrot.slane %v44, 2
    %v46 = vadd.f32 %v44, %v45
    %v47 = vrot.slane %v46, 1
    %v48 = vadd.f32 %v46, %v47
    %v49 = vmul.f32 %v36, 0.0009765625
    %v50 = vmul.f32 %v42, 0.0009765625
    %v51 = vmul.f32 %v48, 0.0009765625
    %v52 = vsub.f32 %v22, %v49
    %v53 = vsub.f32 %v23, %v50
    %v54 = vsub.f32 %v24, %v51
    %v55 = vmul.f32 %v52, %v52
    %v56 = vmul.f32 %v53, %v53
    %v57 = vmul.f32 %v54, %v54
    %58 = vadd.xlane.f32.xlu0 %v55
    %v59 = vpop.xlane.xlu0 %58
    %60 = vadd.xlane.f32.xlu0 %v56
    %v61 = vpop.xlane.xlu0 %60
    %62 = vadd.xlane.f32.xlu0 %v57
    %v63 = vpop.xlane.xlu0 %62
    %v64 = vrsqrt.pop %v59
    %v65 = vmul.f32 %v59, %v64
    %vm66 = vcmp.eq.f32.partialorder %v59, inf
    %v67 = vsel %vm66, %v59, %v65
    %vm68 = vcmp.eq.f32.partialorder %v59, 0.0
    %v69 = vand.u32 %v59, 2147483648
    %v70 = vsel %vm68, %v69, %v67
    %v71 = vrsqrt.pop %v61
    %v72 = vmul.f32 %v61, %v71
    %vm73 = vcmp.eq.f32.partialorder %v61, inf
    %v74 = vsel %vm73, %v61, %v72
    %vm75 = vcmp.eq.f32.partialorder %v61, 0.0
    %v76 = vand.u32 %v61, 2147483648
    %v77 = vsel %vm75, %v76, %v74
    %v78 = vrsqrt.pop %v63
    %v79 = vmul.f32 %v63, %v78
    %vm80 = vcmp.eq.f32.partialorder %v63, inf
    %v81 = vsel %vm80, %v63, %v79
    %vm82 = vcmp.eq.f32.partialorder %v63, 0.0
    %v83 = vand.u32 %v63, 2147483648
    %v84 = vsel %vm82, %v83, %v81
    %v85 = vmax.f32 %v70, 1e-12
    %v86 = vmax.f32 %v77, 1e-12
    %v87 = vmax.f32 %v84, 1e-12
    %v88 = vrcp.pop %v85
    %v89 = vmul.f32 %v52, %v88
    %v90 = vrcp.pop %v86
    %v91 = vmul.f32 %v53, %v90
    %v92 = vrcp.pop %v87
    %v93 = vmul.f32 %v54, %v92
    %94 = vmatprep.subr.mxu0 0.0
    %95 = vmatpush1.xpose.msra.mxu0 %v89
    %96 = vmatprep.subr.mxu0 0.0
    %97 = vmatpush1.xpose.msra.mxu0 %v91
    %98 = vmatprep.subr.mxu0 0.0
    %99 = vmatpush1.xpose.msra.mxu0 %v93
    %100 = vmatprep.subr.mxu0 0.0
    %101 = vmatpush1.xpose.msra.mxu0 0.0
    %102 = vmatprep.subr.mxu0 0.0
    %103 = vmatpush1.xpose.msra.mxu0 0.0
    %104 = vmatprep.subr.mxu0 0.0
    %105 = vmatpush1.xpose.msra.mxu0 0.0
    %106 = vmatprep.subr.mxu0 0.0
    %107 = vmatpush1.xpose.msra.mxu0 0.0
    %108 = vmatprep.subr.mxu0 0.0
    %109 = vmatpush1.xpose.msra.mxu0 0.0
    %110 = vmatprep.subr.mxu0 0.0
    %111 = vmatpush1.xpose.msra.mxu0 0.0
    %112 = vmatprep.subr.mxu0 0.0
    %113 = vmatpush1.xpose.msra.mxu0 0.0
    %114 = vmatprep.subr.mxu0 0.0
    %115 = vmatpush1.xpose.msra.mxu0 0.0
    %116 = vmatprep.subr.mxu0 0.0
    %117 = vmatpush1.xpose.msra.mxu0 0.0
    %118 = vmatprep.subr.mxu0 0.0
    %119 = vmatpush1.xpose.msra.mxu0 0.0
    %120 = vmatprep.subr.mxu0 0.0
    %121 = vmatpush1.xpose.msra.mxu0 0.0
    %122 = vmatprep.subr.mxu0 0.0
    %123 = vmatpush1.xpose.msra.mxu0 0.0
    %124 = vmatprep.subr.mxu0 0.0
    %125 = vmatpush1.xpose.msra.mxu0 0.0
    %126 = vmatprep.subr.mxu0 0.0
    %127 = vmatpush1.xpose.msra.mxu0 0.0
    %128 = vmatprep.subr.mxu0 0.0
    %129 = vmatpush1.xpose.msra.mxu0 0.0
    %130 = vmatprep.subr.mxu0 0.0
    %131 = vmatpush1.xpose.msra.mxu0 0.0
    %132 = vmatprep.subr.mxu0 0.0
    %133 = vmatpush1.xpose.msra.mxu0 0.0
    %134 = vmatprep.subr.mxu0 0.0
    %135 = vmatpush1.xpose.msra.mxu0 0.0
    %136 = vmatprep.subr.mxu0 0.0
    %137 = vmatpush1.xpose.msra.mxu0 0.0
    %138 = vmatprep.subr.mxu0 0.0
    %139 = vmatpush1.xpose.msra.mxu0 0.0
    %140 = vmatprep.subr.mxu0 0.0
    %141 = vmatpush1.xpose.msra.mxu0 0.0
    %142 = vmatprep.subr.mxu0 0.0
    %143 = vmatpush1.xpose.msra.mxu0 0.0
    %144 = vmatprep.subr.mxu0 0.0
    %145 = vmatpush1.xpose.msra.mxu0 0.0
    %146 = vmatprep.subr.mxu0 0.0
    %147 = vmatpush1.xpose.msra.mxu0 0.0
    %148 = vmatprep.subr.mxu0 0.0
    %149 = vmatpush1.xpose.msra.mxu0 0.0
    %150 = vmatprep.subr.mxu0 0.0
    %151 = vmatpush1.xpose.msra.mxu0 0.0
    %152 = vmatprep.subr.mxu0 0.0
    %153 = vmatpush1.xpose.msra.mxu0 0.0
    %154 = vmatprep.subr.mxu0 0.0
    %155 = vmatpush1.xpose.msra.mxu0 0.0
    %156 = vmatprep.subr.mxu0 0.0
    %157 = vmatpush1.xpose.msra.mxu0 0.0
    %158 = vmatprep.mubr.f32.mxu0 0.0
    %159 = vmatmul.mubr.f32.gmra.mrb[0].mxu0 %v89
    %v160 = vpop.f32.mrb[0].mxu0
    %v161 = vadd.f32 0.0, %v160
    %v162 = vpop.f32.mrb[0].mxu0
    %163 = vmatprep.mubr.f32.mxu0 0.0
    %164 = vmatmul.mubr.f32.gmra.mrb[0].mxu0 %v91
    %v165 = vpop.f32.mrb[0].mxu0
    %v166 = vadd.f32 0.0, %v165
    %v167 = vpop.f32.mrb[0].mxu0
    %168 = vmatprep.mubr.f32.mxu0 0.0
    %169 = vmatmul.mubr.f32.gmra.mrb[0].mxu0 %v93
    %v170 = vpop.f32.mrb[0].mxu0
    %v171 = vadd.f32 0.0, %v170
    %v172 = vpop.f32.mrb[0].mxu0
    %173 = vdwg.mxu0
    %v174 = vmul.f32 %v161, 2.0
    %v175 = vmul.f32 %v166, 2.0
    %v176 = vmul.f32 %v171, 2.0
    %v177 = vlaneseq
    %v178 = vshrl.u32 %v177, 7
    %v179 = vadd.s32 %v178, 8
    %v180 = vadd.s32 %v178, 16
    %v181 = vlaneseq
    %v182 = vand.u32 %v181, 127
    %vm183 = vcmp.eq.s32.totalorder %v178, %v182
    %vm184 = vcmp.eq.s32.totalorder %v179, %v182
    %vm185 = vcmp.eq.s32.totalorder %v180, %v182
    %v186 = vsel %vm183, -1e+30, %v174
    %v187 = vsel %vm184, -1e+30, %v175
    %v188 = vsel %vm185, -1e+30, %v176
    %vm189 = vcmask 195584
    %v190 = vsel %vm189, %v186, -inf
    %191 = vmax.xlane.f32.xlu0 %v190
    %v192 = vpop.xlane.xlu0 %191
    %v193 = vsel %vm189, %v187, -inf
    %194 = vmax.xlane.f32.xlu0 %v193
    %v195 = vpop.xlane.xlu0 %194
    %v196 = vsel %vm189, %v188, -inf
    %197 = vmax.xlane.f32.xlu0 %v196
    %v198 = vpop.xlane.xlu0 %197
    %v199 = vsub.f32 %v186, %v192
    %v200 = vsub.f32 %v187, %v195
    %v201 = vsub.f32 %v188, %v198
    %v202 = vmul.f32 %v199, 1.442695
    %v203 = vpow.pop %v202
    %v204 = vmul.f32 %v200, 1.442695
    %v205 = vpow.pop %v204
    %v206 = vmul.f32 %v201, 1.442695
    %v207 = vpow.pop %v206
    %vm208 = vcmask 64512
    %v209 = vsel %vm208, %v203, 0.0
    %210 = vadd.xlane.f32.xlu0 %v209
    %v211 = vpop.xlane.xlu0 %210
    %v212 = vsel %vm208, %v205, 0.0
    %213 = vadd.xlane.f32.xlu0 %v212
    %v214 = vpop.xlane.xlu0 %213
    %v215 = vsel %vm208, %v207, 0.0
    %216 = vadd.xlane.f32.xlu0 %v215
    %v217 = vpop.xlane.xlu0 %216
    %221 = vrot.lane.b32.xlu0 %v203, 120
    %v222 = vpop.permute.xlu0 %221
    %223 = vrot.lane.b32.xlu0 %v205, 120
    %v224 = vpop.permute.xlu0 %223
    %225 = vrot.lane.b32.xlu0 %v207, 120
    %v226 = vpop.permute.xlu0 %225
    %v230 = vsel %vm208, %v222, 0.0
    %231 = vadd.xlane.f32.xlu0 %v230
    %v232 = vpop.xlane.xlu0 %231
    %v233 = vsel %vm208, %v224, 0.0
    %234 = vadd.xlane.f32.xlu0 %v233
    %v235 = vpop.xlane.xlu0 %234
    %v236 = vsel %vm208, %v226, 0.0
    %237 = vadd.xlane.f32.xlu0 %v236
    %v238 = vpop.xlane.xlu0 %237
    %239 = vrot.lane.b32.xlu0 %v203, 112
    %v240 = vpop.permute.xlu0 %239
    %241 = vrot.lane.b32.xlu0 %v205, 112
    %v242 = vpop.permute.xlu0 %241
    %243 = vrot.lane.b32.xlu0 %v207, 112
    %v244 = vpop.permute.xlu0 %243
    %v248 = vsel %vm208, %v240, 0.0
    %249 = vadd.xlane.f32.xlu0 %v248
    %v250 = vpop.xlane.xlu0 %249
    %v251 = vsel %vm208, %v242, 0.0
    %252 = vadd.xlane.f32.xlu0 %v251
    %v253 = vpop.xlane.xlu0 %252
    %v254 = vsel %vm208, %v244, 0.0
    %255 = vadd.xlane.f32.xlu0 %v254
    %v256 = vpop.xlane.xlu0 %255
    %v257 = vadd.f32 %v211, %v232
    %v258 = vadd.f32 %v214, %v235
    %v259 = vlog2.pop %v257
    %v260 = vmul.f32 %v259, 0.6931472
    %v261 = vlog2.pop %v258
    %v262 = vmul.f32 %v261, 0.6931472
    %v263 = vadd.f32 %v192, %v260
    %v264 = vadd.f32 %v195, %v262
    %v265 = vadd.f32 %v263, 0.0
    %v266 = vrot.slane %v265, 4
    %v267 = vadd.f32 %v265, %v266
    %v268 = vrot.slane %v267, 2
    %v269 = vadd.f32 %v267, %v268
    %v270 = vrot.slane %v269, 1
    %v271 = vadd.f32 %v269, %v270
    %v272 = vadd.f32 %v264, 0.0
    %v273 = vrot.slane %v272, 4
    %v274 = vadd.f32 %v272, %v273
    %v275 = vrot.slane %v274, 2
    %v276 = vadd.f32 %v274, %v275
    %v277 = vrot.slane %v276, 1
    %v278 = vadd.f32 %v276, %v277
    %v279 = vadd.f32 %v271, %v278
    %v280 = vmul.f32 %v89, %v91
    %281 = vadd.xlane.f32.xlu0 %v280
    %v282 = vpop.xlane.xlu0 %281
    %v283 = vrot.slane %v282, 4
    %v284 = vadd.f32 %v282, %v283
    %v285 = vrot.slane %v284, 2
    %v286 = vadd.f32 %v284, %v285
    %v287 = vrot.slane %v286, 1
    %v288 = vadd.f32 %v286, %v287
    %v289 = vmul.f32 %v288, 2.0
    %v290 = vmul.f32 %v289, 2.0
    %v291 = vsub.f32 %v279, %v290
    %v292 = vmul.f32 %v291, 0.0625
    %v293 = vadd.f32 %v292, 0.0
    %v294 = vadd.f32 %v211, %v250
    %v295 = vadd.f32 %v217, %v256
    %v296 = vlog2.pop %v294
    %v297 = vmul.f32 %v296, 0.6931472
    %v298 = vlog2.pop %v295
    %v299 = vmul.f32 %v298, 0.6931472
    %v300 = vadd.f32 %v192, %v297
    %v301 = vadd.f32 %v198, %v299
    %v302 = vadd.f32 %v300, 0.0
    %v303 = vrot.slane %v302, 4
    %v304 = vadd.f32 %v302, %v303
    %v305 = vrot.slane %v304, 2
    %v306 = vadd.f32 %v304, %v305
    %v307 = vrot.slane %v306, 1
    %v308 = vadd.f32 %v306, %v307
    %v309 = vadd.f32 %v301, 0.0
    %v310 = vrot.slane %v309, 4
    %v311 = vadd.f32 %v309, %v310
    %v312 = vrot.slane %v311, 2
    %v313 = vadd.f32 %v311, %v312
    %v314 = vrot.slane %v313, 1
    %v315 = vadd.f32 %v313, %v314
    %v316 = vadd.f32 %v308, %v315
    %v317 = vmul.f32 %v89, %v93
    %318 = vadd.xlane.f32.xlu0 %v317
    %v319 = vpop.xlane.xlu0 %318
    %v320 = vrot.slane %v319, 4
    %v321 = vadd.f32 %v319, %v320
    %v322 = vrot.slane %v321, 2
    %v323 = vadd.f32 %v321, %v322
    %v324 = vrot.slane %v323, 1
    %v325 = vadd.f32 %v323, %v324
    %v326 = vmul.f32 %v325, 2.0
    %v327 = vmul.f32 %v326, 2.0
    %v328 = vsub.f32 %v316, %v327
    %v329 = vmul.f32 %v328, 0.0625
    %v330 = vadd.f32 %v293, %v329
    %v331 = vadd.f32 %v235, %v253
    %v332 = vadd.f32 %v238, %v256
    %v333 = vlog2.pop %v331
    %v334 = vmul.f32 %v333, 0.6931472
    %v335 = vlog2.pop %v332
    %v336 = vmul.f32 %v335, 0.6931472
    %v337 = vadd.f32 %v195, %v334
    %v338 = vadd.f32 %v198, %v336
    %v339 = vadd.f32 %v337, 0.0
    %v340 = vrot.slane %v339, 4
    %v341 = vadd.f32 %v339, %v340
    %v342 = vrot.slane %v341, 2
    %v343 = vadd.f32 %v341, %v342
    %v344 = vrot.slane %v343, 1
    %v345 = vadd.f32 %v343, %v344
    %v346 = vadd.f32 %v338, 0.0
    %v347 = vrot.slane %v346, 4
    %v348 = vadd.f32 %v346, %v347
    %v349 = vrot.slane %v348, 2
    %v350 = vadd.f32 %v348, %v349
    %v351 = vrot.slane %v350, 1
    %v352 = vadd.f32 %v350, %v351
    %v353 = vadd.f32 %v345, %v352
    %v354 = vmul.f32 %v91, %v93
    %355 = vadd.xlane.f32.xlu0 %v354
    %v356 = vpop.xlane.xlu0 %355
    %v357 = vrot.slane %v356, 4
    %v358 = vadd.f32 %v356, %v357
    %v359 = vrot.slane %v358, 2
    %v360 = vadd.f32 %v358, %v359
    %v361 = vrot.slane %v360, 1
    %v362 = vadd.f32 %v360, %v361
    %v363 = vmul.f32 %v362, 2.0
    %v364 = vmul.f32 %v363, 2.0
    %v365 = vsub.f32 %v353, %v364
    %v366 = vmul.f32 %v365, 0.0625
    %v367 = vadd.f32 %v330, %v366
    %v368 = vld [vmem:[%s2] sm:$0xff]
    %v369 = vld [vmem:[%s2 + $0x8] sm:$0xff]
    %v370 = vld [vmem:[%s2 + $0x10] sm:$0xff]
    %v371 = vld [vmem:[%s2 + $0x18] sm:$0xff]
    %v372 = vld [vmem:[%s2 + $0x20] sm:$0xff]
    %v373 = vld [vmem:[%s2 + $0x28] sm:$0xff]
    %v374 = vld [vmem:[%s2 + $0x30] sm:$0xff]
    %v375 = vld [vmem:[%s2 + $0x38] sm:$0xff]
    %v376 = vld [vmem:[%s2 + $0x40] sm:$0xff]
    %v377 = vld [vmem:[%s2 + $0x48] sm:$0xff]
    %v378 = vld [vmem:[%s2 + $0x50] sm:$0xff]
    %v379 = vld [vmem:[%s2 + $0x58] sm:$0xff]
    %v380 = vld [vmem:[%s2 + $0x60] sm:$0xff]
    %v381 = vld [vmem:[%s2 + $0x68] sm:$0xff]
    %v382 = vld [vmem:[%s2 + $0x70] sm:$0xff]
    %v383 = vld [vmem:[%s2 + $0x78] sm:$0xff]
    %v384 = vld [vmem:[%s2 + $0x80] sm:$0xff]
    %v385 = vld [vmem:[%s2 + $0x88] sm:$0xff]
    %v386 = vadd.f32 %v368, %v369
    %387 = vadd.xlane.f32.xlu0 %v386
    %v388 = vpop.xlane.xlu0 %387
    %v389 = vadd.f32 %v370, %v371
    %390 = vadd.xlane.f32.xlu0 %v389
    %v391 = vpop.xlane.xlu0 %390
    %v392 = vadd.f32 %v372, %v373
    %393 = vadd.xlane.f32.xlu0 %v392
    %v394 = vpop.xlane.xlu0 %393
    %v395 = vadd.f32 %v374, %v375
    %396 = vadd.xlane.f32.xlu0 %v395
    %v397 = vpop.xlane.xlu0 %396
    %v398 = vadd.f32 %v376, %v377
    %399 = vadd.xlane.f32.xlu0 %v398
    %v400 = vpop.xlane.xlu0 %399
    %v401 = vadd.f32 %v378, %v379
    %402 = vadd.xlane.f32.xlu0 %v401
    %v403 = vpop.xlane.xlu0 %402
    %v404 = vadd.f32 %v380, %v381
    %405 = vadd.xlane.f32.xlu0 %v404
    %v406 = vpop.xlane.xlu0 %405
    %v407 = vadd.f32 %v382, %v383
    %408 = vadd.xlane.f32.xlu0 %v407
    %v409 = vpop.xlane.xlu0 %408
    %v410 = vadd.f32 %v384, %v385
    %411 = vadd.xlane.f32.xlu0 %v410
    %v412 = vpop.xlane.xlu0 %411
    %v413 = vrot.slane %v388, 4
    %v414 = vadd.f32 %v388, %v413
    %v415 = vrot.slane %v414, 2
    %v416 = vadd.f32 %v414, %v415
    %v417 = vrot.slane %v416, 1
    %v418 = vadd.f32 %v416, %v417
    %v419 = vrot.slane %v391, 4
    %v420 = vadd.f32 %v391, %v419
    %v421 = vrot.slane %v420, 2
    %v422 = vadd.f32 %v420, %v421
    %v423 = vrot.slane %v422, 1
    %v424 = vadd.f32 %v422, %v423
    %v425 = vrot.slane %v394, 4
    %v426 = vadd.f32 %v394, %v425
    %v427 = vrot.slane %v426, 2
    %v428 = vadd.f32 %v426, %v427
    %v429 = vrot.slane %v428, 1
    %v430 = vadd.f32 %v428, %v429
    %v431 = vrot.slane %v397, 4
    %v432 = vadd.f32 %v397, %v431
    %v433 = vrot.slane %v432, 2
    %v434 = vadd.f32 %v432, %v433
    %v435 = vrot.slane %v434, 1
    %v436 = vadd.f32 %v434, %v435
    %v437 = vrot.slane %v400, 4
    %v438 = vadd.f32 %v400, %v437
    %v439 = vrot.slane %v438, 2
    %v440 = vadd.f32 %v438, %v439
    %v441 = vrot.slane %v440, 1
    %v442 = vadd.f32 %v440, %v441
    %v443 = vrot.slane %v403, 4
    %v444 = vadd.f32 %v403, %v443
    %v445 = vrot.slane %v444, 2
    %v446 = vadd.f32 %v444, %v445
    %v447 = vrot.slane %v446, 1
    %v448 = vadd.f32 %v446, %v447
    %v449 = vrot.slane %v406, 4
    %v450 = vadd.f32 %v406, %v449
    %v451 = vrot.slane %v450, 2
    %v452 = vadd.f32 %v450, %v451
    %v453 = vrot.slane %v452, 1
    %v454 = vadd.f32 %v452, %v453
    %v455 = vrot.slane %v409, 4
    %v456 = vadd.f32 %v409, %v455
    %v457 = vrot.slane %v456, 2
    %v458 = vadd.f32 %v456, %v457
    %v459 = vrot.slane %v458, 1
    %v460 = vadd.f32 %v458, %v459
    %v461 = vrot.slane %v412, 4
    %v462 = vadd.f32 %v412, %v461
    %v463 = vrot.slane %v462, 2
    %v464 = vadd.f32 %v462, %v463
    %v465 = vrot.slane %v464, 1
    %v466 = vadd.f32 %v464, %v465
    %v467 = vmul.f32 %v418, 0.00048828125
    %v468 = vmul.f32 %v424, 0.00048828125
    %v469 = vmul.f32 %v430, 0.00048828125
    %v470 = vmul.f32 %v436, 0.00048828125
    %v471 = vmul.f32 %v442, 0.00048828125
    %v472 = vmul.f32 %v448, 0.00048828125
    %v473 = vmul.f32 %v454, 0.00048828125
    %v474 = vmul.f32 %v460, 0.00048828125
    %v475 = vmul.f32 %v466, 0.00048828125
    %v476 = vsub.f32 %v368, %v467
    %v477 = vsub.f32 %v369, %v467
    %v478 = vsub.f32 %v370, %v468
    %v479 = vsub.f32 %v371, %v468
    %v480 = vsub.f32 %v372, %v469
    %v481 = vsub.f32 %v373, %v469
    %v482 = vsub.f32 %v374, %v470
    %v483 = vsub.f32 %v375, %v470
    %v484 = vsub.f32 %v376, %v471
    %v485 = vsub.f32 %v377, %v471
    %v486 = vsub.f32 %v378, %v472
    %v487 = vsub.f32 %v379, %v472
    %v488 = vsub.f32 %v380, %v473
    %v489 = vsub.f32 %v381, %v473
    %v490 = vsub.f32 %v382, %v474
    %v491 = vsub.f32 %v383, %v474
    %v492 = vsub.f32 %v384, %v475
    %v493 = vsub.f32 %v385, %v475
    %v494 = vmul.f32 %v476, %v476
    %v495 = vmul.f32 %v477, %v477
    %v496 = vmul.f32 %v478, %v478
    %v497 = vmul.f32 %v479, %v479
    %v498 = vmul.f32 %v480, %v480
    %v499 = vmul.f32 %v481, %v481
    %v500 = vmul.f32 %v482, %v482
    %v501 = vmul.f32 %v483, %v483
    %v502 = vmul.f32 %v484, %v484
    %v503 = vmul.f32 %v485, %v485
    %v504 = vmul.f32 %v486, %v486
    %v505 = vmul.f32 %v487, %v487
    %v506 = vmul.f32 %v488, %v488
    %v507 = vmul.f32 %v489, %v489
    %v508 = vmul.f32 %v490, %v490
    %v509 = vmul.f32 %v491, %v491
    %v510 = vmul.f32 %v492, %v492
    %v511 = vmul.f32 %v493, %v493
    %v512 = vadd.f32 %v494, %v495
    %513 = vadd.xlane.f32.xlu0 %v512
    %v514 = vpop.xlane.xlu0 %513
    %v515 = vadd.f32 %v496, %v497
    %516 = vadd.xlane.f32.xlu0 %v515
    %v517 = vpop.xlane.xlu0 %516
    %v518 = vadd.f32 %v498, %v499
    %519 = vadd.xlane.f32.xlu0 %v518
    %v520 = vpop.xlane.xlu0 %519
    %v521 = vadd.f32 %v500, %v501
    %522 = vadd.xlane.f32.xlu0 %v521
    %v523 = vpop.xlane.xlu0 %522
    %v524 = vadd.f32 %v502, %v503
    %525 = vadd.xlane.f32.xlu0 %v524
    %v526 = vpop.xlane.xlu0 %525
    %v527 = vadd.f32 %v504, %v505
    %528 = vadd.xlane.f32.xlu0 %v527
    %v529 = vpop.xlane.xlu0 %528
    %v530 = vadd.f32 %v506, %v507
    %531 = vadd.xlane.f32.xlu0 %v530
    %v532 = vpop.xlane.xlu0 %531
    %v533 = vadd.f32 %v508, %v509
    %534 = vadd.xlane.f32.xlu0 %v533
    %v535 = vpop.xlane.xlu0 %534
    %v536 = vadd.f32 %v510, %v511
    %537 = vadd.xlane.f32.xlu0 %v536
    %v538 = vpop.xlane.xlu0 %537
    %v539 = vrsqrt.pop %v514
    %v540 = vmul.f32 %v514, %v539
    %vm541 = vcmp.eq.f32.partialorder %v514, inf
    %v542 = vsel %vm541, %v514, %v540
    %vm543 = vcmp.eq.f32.partialorder %v514, 0.0
    %v544 = vand.u32 %v514, 2147483648
    %v545 = vsel %vm543, %v544, %v542
    %v546 = vrsqrt.pop %v517
    %v547 = vmul.f32 %v517, %v546
    %vm548 = vcmp.eq.f32.partialorder %v517, inf
    %v549 = vsel %vm548, %v517, %v547
    %vm550 = vcmp.eq.f32.partialorder %v517, 0.0
    %v551 = vand.u32 %v517, 2147483648
    %v552 = vsel %vm550, %v551, %v549
    %v553 = vrsqrt.pop %v520
    %v554 = vmul.f32 %v520, %v553
    %vm555 = vcmp.eq.f32.partialorder %v520, inf
    %v556 = vsel %vm555, %v520, %v554
    %vm557 = vcmp.eq.f32.partialorder %v520, 0.0
    %v558 = vand.u32 %v520, 2147483648
    %v559 = vsel %vm557, %v558, %v556
    %v560 = vrsqrt.pop %v523
    %v561 = vmul.f32 %v523, %v560
    %vm562 = vcmp.eq.f32.partialorder %v523, inf
    %v563 = vsel %vm562, %v523, %v561
    %vm564 = vcmp.eq.f32.partialorder %v523, 0.0
    %v565 = vand.u32 %v523, 2147483648
    %v566 = vsel %vm564, %v565, %v563
    %v567 = vrsqrt.pop %v526
    %v568 = vmul.f32 %v526, %v567
    %vm569 = vcmp.eq.f32.partialorder %v526, inf
    %v570 = vsel %vm569, %v526, %v568
    %vm571 = vcmp.eq.f32.partialorder %v526, 0.0
    %v572 = vand.u32 %v526, 2147483648
    %v573 = vsel %vm571, %v572, %v570
    %v574 = vrsqrt.pop %v529
    %v575 = vmul.f32 %v529, %v574
    %vm576 = vcmp.eq.f32.partialorder %v529, inf
    %v577 = vsel %vm576, %v529, %v575
    %vm578 = vcmp.eq.f32.partialorder %v529, 0.0
    %v579 = vand.u32 %v529, 2147483648
    %v580 = vsel %vm578, %v579, %v577
    %v581 = vrsqrt.pop %v532
    %v582 = vmul.f32 %v532, %v581
    %vm583 = vcmp.eq.f32.partialorder %v532, inf
    %v584 = vsel %vm583, %v532, %v582
    %vm585 = vcmp.eq.f32.partialorder %v532, 0.0
    %v586 = vand.u32 %v532, 2147483648
    %v587 = vsel %vm585, %v586, %v584
    %v588 = vrsqrt.pop %v535
    %v589 = vmul.f32 %v535, %v588
    %vm590 = vcmp.eq.f32.partialorder %v535, inf
    %v591 = vsel %vm590, %v535, %v589
    %vm592 = vcmp.eq.f32.partialorder %v535, 0.0
    %v593 = vand.u32 %v535, 2147483648
    %v594 = vsel %vm592, %v593, %v591
    %v595 = vrsqrt.pop %v538
    %v596 = vmul.f32 %v538, %v595
    %vm597 = vcmp.eq.f32.partialorder %v538, inf
    %v598 = vsel %vm597, %v538, %v596
    %vm599 = vcmp.eq.f32.partialorder %v538, 0.0
    %v600 = vand.u32 %v538, 2147483648
    %v601 = vsel %vm599, %v600, %v598
    %v602 = vmax.f32 %v545, 1e-12
    %v603 = vmax.f32 %v552, 1e-12
    %v604 = vmax.f32 %v559, 1e-12
    %v605 = vmax.f32 %v566, 1e-12
    %v606 = vmax.f32 %v573, 1e-12
    %v607 = vmax.f32 %v580, 1e-12
    %v608 = vmax.f32 %v587, 1e-12
    %v609 = vmax.f32 %v594, 1e-12
    %v610 = vmax.f32 %v601, 1e-12
    %v611 = vrcp.pop %v602
    %v612 = vmul.f32 %v476, %v611
    %v613 = vmul.f32 %v477, %v611
    %v614 = vrcp.pop %v603
    %v615 = vmul.f32 %v478, %v614
    %v616 = vmul.f32 %v479, %v614
    %v617 = vrcp.pop %v604
    %v618 = vmul.f32 %v480, %v617
    %v619 = vmul.f32 %v481, %v617
    %v620 = vrcp.pop %v605
    %v621 = vmul.f32 %v482, %v620
    %v622 = vmul.f32 %v483, %v620
    %v623 = vrcp.pop %v606
    %v624 = vmul.f32 %v484, %v623
    %v625 = vmul.f32 %v485, %v623
    %v626 = vrcp.pop %v607
    %v627 = vmul.f32 %v486, %v626
    %v628 = vmul.f32 %v487, %v626
    %v629 = vrcp.pop %v608
    %v630 = vmul.f32 %v488, %v629
    %v631 = vmul.f32 %v489, %v629
    %v632 = vrcp.pop %v609
    %v633 = vmul.f32 %v490, %v632
    %v634 = vmul.f32 %v491, %v632
    %v635 = vrcp.pop %v610
    %v636 = vmul.f32 %v492, %v635
    %v637 = vmul.f32 %v493, %v635
    %v638 = vsub.f32 %v621, %v612
    %v639 = vsub.f32 %v622, %v613
    %v640 = vmul.f32 %v638, %v638
    %v641 = vmul.f32 %v639, %v639
    %v642 = vadd.f32 %v640, %v641
    %643 = vadd.xlane.f32.xlu0 %v642
    %v644 = vpop.xlane.xlu0 %643
    %v645 = vrot.slane %v644, 4
    %v646 = vadd.f32 %v644, %v645
    %v647 = vrot.slane %v646, 2
    %v648 = vadd.f32 %v646, %v647
    %v649 = vrot.slane %v648, 1
    %v650 = vadd.f32 %v648, %v649
    %v651 = vrsqrt.pop %v650
    %v652 = vmul.f32 %v650, %v651
    %vm653 = vcmp.eq.f32.partialorder %v650, inf
    %v654 = vsel %vm653, %v650, %v652
    %vm655 = vcmp.eq.f32.partialorder %v650, 0.0
    %v656 = vand.u32 %v650, 2147483648
    %v657 = vsel %vm655, %v656, %v654
    %v658 = vadd.f32 %v657, 0.0
    %v659 = vsub.f32 %v624, %v612
    %v660 = vsub.f32 %v625, %v613
    %v661 = vmul.f32 %v659, %v659
    %v662 = vmul.f32 %v660, %v660
    %v663 = vadd.f32 %v661, %v662
    %664 = vadd.xlane.f32.xlu0 %v663
    %v665 = vpop.xlane.xlu0 %664
    %v666 = vrot.slane %v665, 4
    %v667 = vadd.f32 %v665, %v666
    %v668 = vrot.slane %v667, 2
    %v669 = vadd.f32 %v667, %v668
    %v670 = vrot.slane %v669, 1
    %v671 = vadd.f32 %v669, %v670
    %v672 = vrsqrt.pop %v671
    %v673 = vmul.f32 %v671, %v672
    %vm674 = vcmp.eq.f32.partialorder %v671, inf
    %v675 = vsel %vm674, %v671, %v673
    %vm676 = vcmp.eq.f32.partialorder %v671, 0.0
    %v677 = vand.u32 %v671, 2147483648
    %v678 = vsel %vm676, %v677, %v675
    %v679 = vadd.f32 %v658, %v678
    %v680 = vsub.f32 %v627, %v615
    %v681 = vsub.f32 %v628, %v616
    %v682 = vmul.f32 %v680, %v680
    %v683 = vmul.f32 %v681, %v681
    %v684 = vadd.f32 %v682, %v683
    %685 = vadd.xlane.f32.xlu0 %v684
    %v686 = vpop.xlane.xlu0 %685
    %v687 = vrot.slane %v686, 4
    %v688 = vadd.f32 %v686, %v687
    %v689 = vrot.slane %v688, 2
    %v690 = vadd.f32 %v688, %v689
    %v691 = vrot.slane %v690, 1
    %v692 = vadd.f32 %v690, %v691
    %v693 = vrsqrt.pop %v692
    %v694 = vmul.f32 %v692, %v693
    %vm695 = vcmp.eq.f32.partialorder %v692, inf
    %v696 = vsel %vm695, %v692, %v694
    %vm697 = vcmp.eq.f32.partialorder %v692, 0.0
    %v698 = vand.u32 %v692, 2147483648
    %v699 = vsel %vm697, %v698, %v696
    %v700 = vadd.f32 %v679, %v699
    %v701 = vsub.f32 %v630, %v615
    %v702 = vsub.f32 %v631, %v616
    %v703 = vmul.f32 %v701, %v701
    %v704 = vmul.f32 %v702, %v702
    %v705 = vadd.f32 %v703, %v704
    %706 = vadd.xlane.f32.xlu0 %v705
    %v707 = vpop.xlane.xlu0 %706
    %v708 = vrot.slane %v707, 4
    %v709 = vadd.f32 %v707, %v708
    %v710 = vrot.slane %v709, 2
    %v711 = vadd.f32 %v709, %v710
    %v712 = vrot.slane %v711, 1
    %v713 = vadd.f32 %v711, %v712
    %v714 = vrsqrt.pop %v713
    %v715 = vmul.f32 %v713, %v714
    %vm716 = vcmp.eq.f32.partialorder %v713, inf
    %v717 = vsel %vm716, %v713, %v715
    %vm718 = vcmp.eq.f32.partialorder %v713, 0.0
    %v719 = vand.u32 %v713, 2147483648
    %v720 = vsel %vm718, %v719, %v717
    %v721 = vadd.f32 %v700, %v720
    %v722 = vsub.f32 %v633, %v618
    %v723 = vsub.f32 %v634, %v619
    %v724 = vmul.f32 %v722, %v722
    %v725 = vmul.f32 %v723, %v723
    %v726 = vadd.f32 %v724, %v725
    %727 = vadd.xlane.f32.xlu0 %v726
    %v728 = vpop.xlane.xlu0 %727
    %v729 = vrot.slane %v728, 4
    %v730 = vadd.f32 %v728, %v729
    %v731 = vrot.slane %v730, 2
    %v732 = vadd.f32 %v730, %v731
    %v733 = vrot.slane %v732, 1
    %v734 = vadd.f32 %v732, %v733
    %v735 = vrsqrt.pop %v734
    %v736 = vmul.f32 %v734, %v735
    %vm737 = vcmp.eq.f32.partialorder %v734, inf
    %v738 = vsel %vm737, %v734, %v736
    %vm739 = vcmp.eq.f32.partialorder %v734, 0.0
    %v740 = vand.u32 %v734, 2147483648
    %v741 = vsel %vm739, %v740, %v738
    %v742 = vadd.f32 %v721, %v741
    %v743 = vsub.f32 %v636, %v618
    %v744 = vsub.f32 %v637, %v619
    %v745 = vmul.f32 %v743, %v743
    %v746 = vmul.f32 %v744, %v744
    %v747 = vadd.f32 %v745, %v746
    %748 = vadd.xlane.f32.xlu0 %v747
    %v749 = vpop.xlane.xlu0 %748
    %v750 = vrot.slane %v749, 4
    %v751 = vadd.f32 %v749, %v750
    %v752 = vrot.slane %v751, 2
    %v753 = vadd.f32 %v751, %v752
    %v754 = vrot.slane %v753, 1
    %v755 = vadd.f32 %v753, %v754
    %v756 = vrsqrt.pop %v755
    %v757 = vmul.f32 %v755, %v756
    %vm758 = vcmp.eq.f32.partialorder %v755, inf
    %v759 = vsel %vm758, %v755, %v757
    %vm760 = vcmp.eq.f32.partialorder %v755, 0.0
    %v761 = vand.u32 %v755, 2147483648
    %v762 = vsel %vm760, %v761, %v759
    %v763 = vadd.f32 %v742, %v762
    %v764 = vld [vmem:[%s3] sm:$0x1]
    %v765 = vld [vmem:[%s4] sm:$0xff]
    %v766 = vld [vmem:[%s4 + $0x8] sm:$0xff]
    %v767 = vld [vmem:[%s4 + $0x10] sm:$0xff]
    %v768 = vld [vmem:[%s4 + $0x18] sm:$0xff]
    %v769 = vld [vmem:[%s4 + $0x20] sm:$0xff]
    %v770 = vld [vmem:[%s4 + $0x28] sm:$0xff]
    %v771 = vadd.f32 %v765, 0.0
    %v772 = vadd.f32 %v766, 0.0
    %v773 = vadd.f32 %v767, 0.0
    %v774 = vadd.f32 %v768, 0.0
    %v775 = vadd.f32 %v769, 0.0
    %v776 = vadd.f32 %v770, 0.0
    %v777 = vrcp.pop %v771
    %v778 = vmul.f32 1.0, %v777
    %v779 = vrcp.pop %v772
    %v780 = vmul.f32 1.0, %v779
    %v781 = vrcp.pop %v773
    %v782 = vmul.f32 1.0, %v781
    %v783 = vrcp.pop %v774
    %v784 = vmul.f32 1.0, %v783
    %v785 = vrcp.pop %v775
    %v786 = vmul.f32 1.0, %v785
    %v787 = vrcp.pop %v776
    %v788 = vmul.f32 1.0, %v787
    %v789 = vadd.f32 %v765, 1.0
    %v790 = vadd.f32 %v766, 1.0
    %v791 = vadd.f32 %v767, 1.0
    %v792 = vadd.f32 %v768, 1.0
    %v793 = vadd.f32 %v769, 1.0
    %v794 = vadd.f32 %v770, 1.0
    %v795 = vrcp.pop %v789
    %v796 = vmul.f32 1.0, %v795
    %v797 = vrcp.pop %v790
    %v798 = vmul.f32 1.0, %v797
    %v799 = vrcp.pop %v791
    %v800 = vmul.f32 1.0, %v799
    %v801 = vrcp.pop %v792
    %v802 = vmul.f32 1.0, %v801
    %v803 = vrcp.pop %v793
    %v804 = vmul.f32 1.0, %v803
    %v805 = vrcp.pop %v794
    %v806 = vmul.f32 1.0, %v805
    %v807 = vadd.f32 %v765, 2.0
    %v808 = vadd.f32 %v766, 2.0
    %v809 = vadd.f32 %v767, 2.0
    %v810 = vadd.f32 %v768, 2.0
    %v811 = vadd.f32 %v769, 2.0
    %v812 = vadd.f32 %v770, 2.0
    %v813 = vrcp.pop %v807
    %v814 = vmul.f32 1.0, %v813
    %v815 = vrcp.pop %v808
    %v816 = vmul.f32 1.0, %v815
    %v817 = vrcp.pop %v809
    %v818 = vmul.f32 1.0, %v817
    %v819 = vrcp.pop %v810
    %v820 = vmul.f32 1.0, %v819
    %v821 = vrcp.pop %v811
    %v822 = vmul.f32 1.0, %v821
    %v823 = vrcp.pop %v812
    %v824 = vmul.f32 1.0, %v823
    %v825 = vadd.f32 %v765, 3.0
    %v826 = vadd.f32 %v766, 3.0
    %v827 = vadd.f32 %v767, 3.0
    %v828 = vadd.f32 %v768, 3.0
    %v829 = vadd.f32 %v769, 3.0
    %v830 = vadd.f32 %v770, 3.0
    %v831 = vrcp.pop %v825
    %v832 = vmul.f32 1.0, %v831
    %v833 = vrcp.pop %v826
    %v834 = vmul.f32 1.0, %v833
    %v835 = vrcp.pop %v827
    %v836 = vmul.f32 1.0, %v835
    %v837 = vrcp.pop %v828
    %v838 = vmul.f32 1.0, %v837
    %v839 = vrcp.pop %v829
    %v840 = vmul.f32 1.0, %v839
    %v841 = vrcp.pop %v830
    %v842 = vmul.f32 1.0, %v841
    %v843 = vadd.f32 %v765, 4.0
    %v844 = vadd.f32 %v766, 4.0
    %v845 = vadd.f32 %v767, 4.0
    %v846 = vadd.f32 %v768, 4.0
    %v847 = vadd.f32 %v769, 4.0
    %v848 = vadd.f32 %v770, 4.0
    %v849 = vrcp.pop %v843
    %v850 = vmul.f32 1.0, %v849
    %v851 = vrcp.pop %v844
    %v852 = vmul.f32 1.0, %v851
    %v853 = vrcp.pop %v845
    %v854 = vmul.f32 1.0, %v853
    %v855 = vrcp.pop %v846
    %v856 = vmul.f32 1.0, %v855
    %v857 = vrcp.pop %v847
    %v858 = vmul.f32 1.0, %v857
    %v859 = vrcp.pop %v848
    %v860 = vmul.f32 1.0, %v859
    %v861 = vadd.f32 %v765, 5.0
    %v862 = vadd.f32 %v766, 5.0
    %v863 = vadd.f32 %v767, 5.0
    %v864 = vadd.f32 %v768, 5.0
    %v865 = vadd.f32 %v769, 5.0
    %v866 = vadd.f32 %v770, 5.0
    %v867 = vrcp.pop %v861
    %v868 = vmul.f32 1.0, %v867
    %v869 = vrcp.pop %v862
    %v870 = vmul.f32 1.0, %v869
    %v871 = vrcp.pop %v863
    %v872 = vmul.f32 1.0, %v871
    %v873 = vrcp.pop %v864
    %v874 = vmul.f32 1.0, %v873
    %v875 = vrcp.pop %v865
    %v876 = vmul.f32 1.0, %v875
    %v877 = vrcp.pop %v866
    %v878 = vmul.f32 1.0, %v877
    %v879 = vadd.f32 %v765, 6.0
    %v880 = vadd.f32 %v766, 6.0
    %v881 = vadd.f32 %v767, 6.0
    %v882 = vadd.f32 %v768, 6.0
    %v883 = vadd.f32 %v769, 6.0
    %v884 = vadd.f32 %v770, 6.0
    %v885 = vrcp.pop %v879
    %v886 = vmul.f32 1.0, %v885
    %v887 = vrcp.pop %v880
    %v888 = vmul.f32 1.0, %v887
    %v889 = vrcp.pop %v881
    %v890 = vmul.f32 1.0, %v889
    %v891 = vrcp.pop %v882
    %v892 = vmul.f32 1.0, %v891
    %v893 = vrcp.pop %v883
    %v894 = vmul.f32 1.0, %v893
    %v895 = vrcp.pop %v884
    %v896 = vmul.f32 1.0, %v895
    %v897 = vadd.f32 %v765, 7.0
    %v898 = vadd.f32 %v766, 7.0
    %v899 = vadd.f32 %v767, 7.0
    %v900 = vadd.f32 %v768, 7.0
    %v901 = vadd.f32 %v769, 7.0
    %v902 = vadd.f32 %v770, 7.0
    %v903 = vrcp.pop %v897
    %v904 = vmul.f32 1.0, %v903
    %v905 = vrcp.pop %v898
    %v906 = vmul.f32 1.0, %v905
    %v907 = vrcp.pop %v899
    %v908 = vmul.f32 1.0, %v907
    %v909 = vrcp.pop %v900
    %v910 = vmul.f32 1.0, %v909
    %v911 = vrcp.pop %v901
    %v912 = vmul.f32 1.0, %v911
    %v913 = vrcp.pop %v902
    %v914 = vmul.f32 1.0, %v913
    %v915 = vmul.f32 %v778, 676.5204
    %v916 = vmul.f32 %v780, 676.5204
    %v917 = vmul.f32 %v782, 676.5204
    %v918 = vmul.f32 %v784, 676.5204
    %v919 = vmul.f32 %v786, 676.5204
    %v920 = vmul.f32 %v788, 676.5204
    %v921 = vadd.f32 %v915, 1.0
    %v922 = vadd.f32 %v916, 1.0
    %v923 = vadd.f32 %v917, 1.0
    %v924 = vadd.f32 %v918, 1.0
    %v925 = vadd.f32 %v919, 1.0
    %v926 = vadd.f32 %v920, 1.0
    %v927 = vmul.f32 %v796, -1259.1392
    %v928 = vmul.f32 %v798, -1259.1392
    %v929 = vmul.f32 %v800, -1259.1392
    %v930 = vmul.f32 %v802, -1259.1392
    %v931 = vmul.f32 %v804, -1259.1392
    %v932 = vmul.f32 %v806, -1259.1392
    %v933 = vadd.f32 %v921, %v927
    %v934 = vadd.f32 %v922, %v928
    %v935 = vadd.f32 %v923, %v929
    %v936 = vadd.f32 %v924, %v930
    %v937 = vadd.f32 %v925, %v931
    %v938 = vadd.f32 %v926, %v932
    %v939 = vmul.f32 %v814, 771.3234
    %v940 = vmul.f32 %v816, 771.3234
    %v941 = vmul.f32 %v818, 771.3234
    %v942 = vmul.f32 %v820, 771.3234
    %v943 = vmul.f32 %v822, 771.3234
    %v944 = vmul.f32 %v824, 771.3234
    %v945 = vadd.f32 %v933, %v939
    %v946 = vadd.f32 %v934, %v940
    %v947 = vadd.f32 %v935, %v941
    %v948 = vadd.f32 %v936, %v942
    %v949 = vadd.f32 %v937, %v943
    %v950 = vadd.f32 %v938, %v944
    %v951 = vmul.f32 %v832, -176.61504
    %v952 = vmul.f32 %v834, -176.61504
    %v953 = vmul.f32 %v836, -176.61504
    %v954 = vmul.f32 %v838, -176.61504
    %v955 = vmul.f32 %v840, -176.61504
    %v956 = vmul.f32 %v842, -176.61504
    %v957 = vadd.f32 %v945, %v951
    %v958 = vadd.f32 %v946, %v952
    %v959 = vadd.f32 %v947, %v953
    %v960 = vadd.f32 %v948, %v954
    %v961 = vadd.f32 %v949, %v955
    %v962 = vadd.f32 %v950, %v956
    %v963 = vmul.f32 %v850, 12.507343
    %v964 = vmul.f32 %v852, 12.507343
    %v965 = vmul.f32 %v854, 12.507343
    %v966 = vmul.f32 %v856, 12.507343
    %v967 = vmul.f32 %v858, 12.507343
    %v968 = vmul.f32 %v860, 12.507343
    %v969 = vadd.f32 %v957, %v963
    %v970 = vadd.f32 %v958, %v964
    %v971 = vadd.f32 %v959, %v965
    %v972 = vadd.f32 %v960, %v966
    %v973 = vadd.f32 %v961, %v967
    %v974 = vadd.f32 %v962, %v968
    %v975 = vmul.f32 %v868, -0.1385711
    %v976 = vmul.f32 %v870, -0.1385711
    %v977 = vmul.f32 %v872, -0.1385711
    %v978 = vmul.f32 %v874, -0.1385711
    %v979 = vmul.f32 %v876, -0.1385711
    %v980 = vmul.f32 %v878, -0.1385711
    %v981 = vadd.f32 %v969, %v975
    %v982 = vadd.f32 %v970, %v976
    %v983 = vadd.f32 %v971, %v977
    %v984 = vadd.f32 %v972, %v978
    %v985 = vadd.f32 %v973, %v979
    %v986 = vadd.f32 %v974, %v980
    %v987 = vmul.f32 %v886, 9.984369e-06
    %v988 = vmul.f32 %v888, 9.984369e-06
    %v989 = vmul.f32 %v890, 9.984369e-06
    %v990 = vmul.f32 %v892, 9.984369e-06
    %v991 = vmul.f32 %v894, 9.984369e-06
    %v992 = vmul.f32 %v896, 9.984369e-06
    %v993 = vadd.f32 %v981, %v987
    %v994 = vadd.f32 %v982, %v988
    %v995 = vadd.f32 %v983, %v989
    %v996 = vadd.f32 %v984, %v990
    %v997 = vadd.f32 %v985, %v991
    %v998 = vadd.f32 %v986, %v992
    %v999 = vmul.f32 %v904, 1.5056327e-07
    %v1000 = vmul.f32 %v906, 1.5056327e-07
    %v1001 = vmul.f32 %v908, 1.5056327e-07
    %v1002 = vmul.f32 %v910, 1.5056327e-07
    %v1003 = vmul.f32 %v912, 1.5056327e-07
    %v1004 = vmul.f32 %v914, 1.5056327e-07
    %v1005 = vadd.f32 %v993, %v999
    %v1006 = vadd.f32 %v994, %v1000
    %v1007 = vadd.f32 %v995, %v1001
    %v1008 = vadd.f32 %v996, %v1002
    %v1009 = vadd.f32 %v997, %v1003
    %v1010 = vadd.f32 %v998, %v1004
    %v1011 = vadd.f32 %v765, 6.5
    %v1012 = vadd.f32 %v766, 6.5
    %v1013 = vadd.f32 %v767, 6.5
    %v1014 = vadd.f32 %v768, 6.5
    %v1015 = vadd.f32 %v769, 6.5
    %v1016 = vadd.f32 %v770, 6.5
    %v1017 = vsub.f32 %v765, 0.5
    %v1018 = vsub.f32 %v766, 0.5
    %v1019 = vsub.f32 %v767, 0.5
    %v1020 = vsub.f32 %v768, 0.5
    %v1021 = vsub.f32 %v769, 0.5
    %v1022 = vsub.f32 %v770, 0.5
    %v1023 = vlog2.pop %v1011
    %v1024 = vmul.f32 %v1023, 0.6931472
    %v1025 = vlog2.pop %v1012
    %v1026 = vmul.f32 %v1025, 0.6931472
    %v1027 = vlog2.pop %v1013
    %v1028 = vmul.f32 %v1027, 0.6931472
    %v1029 = vlog2.pop %v1014
    %v1030 = vmul.f32 %v1029, 0.6931472
    %v1031 = vlog2.pop %v1015
    %v1032 = vmul.f32 %v1031, 0.6931472
    %v1033 = vlog2.pop %v1016
    %v1034 = vmul.f32 %v1033, 0.6931472
    %v1035 = vmul.f32 %v1017, %v1024
    %v1036 = vmul.f32 %v1018, %v1026
    %v1037 = vmul.f32 %v1019, %v1028
    %v1038 = vmul.f32 %v1020, %v1030
    %v1039 = vmul.f32 %v1021, %v1032
    %v1040 = vmul.f32 %v1022, %v1034
    %v1041 = vadd.f32 %v1035, 0.9189385
    %v1042 = vadd.f32 %v1036, 0.9189385
    %v1043 = vadd.f32 %v1037, 0.9189385
    %v1044 = vadd.f32 %v1038, 0.9189385
    %v1045 = vadd.f32 %v1039, 0.9189385
    %v1046 = vadd.f32 %v1040, 0.9189385
    %v1047 = vsub.f32 %v1041, %v1011
    %v1048 = vsub.f32 %v1042, %v1012
    %v1049 = vsub.f32 %v1043, %v1013
    %v1050 = vsub.f32 %v1044, %v1014
    %v1051 = vsub.f32 %v1045, %v1015
    %v1052 = vsub.f32 %v1046, %v1016
    %v1053 = vlog2.pop %v1005
    %v1054 = vmul.f32 %v1053, 0.6931472
    %v1055 = vlog2.pop %v1006
    %v1056 = vmul.f32 %v1055, 0.6931472
    %v1057 = vlog2.pop %v1007
    %v1058 = vmul.f32 %v1057, 0.6931472
    %v1059 = vlog2.pop %v1008
    %v1060 = vmul.f32 %v1059, 0.6931472
    %v1061 = vlog2.pop %v1009
    %v1062 = vmul.f32 %v1061, 0.6931472
    %v1063 = vlog2.pop %v1010
    %v1064 = vmul.f32 %v1063, 0.6931472
    %v1065 = vadd.f32 %v1047, %v1054
    %v1066 = vadd.f32 %v1048, %v1056
    %v1067 = vadd.f32 %v1049, %v1058
    %v1068 = vadd.f32 %v1050, %v1060
    %v1069 = vadd.f32 %v1051, %v1062
    %v1070 = vadd.f32 %v1052, %v1064
    %v1071 = vadd.f32 %v778, %v796
    %v1072 = vadd.f32 %v780, %v798
    %v1073 = vadd.f32 %v782, %v800
    %v1074 = vadd.f32 %v784, %v802
    %v1075 = vadd.f32 %v786, %v804
    %v1076 = vadd.f32 %v788, %v806
    %v1077 = vadd.f32 %v1071, %v814
    %v1078 = vadd.f32 %v1072, %v816
    %v1079 = vadd.f32 %v1073, %v818
    %v1080 = vadd.f32 %v1074, %v820
    %v1081 = vadd.f32 %v1075, %v822
    %v1082 = vadd.f32 %v1076, %v824
    %v1083 = vadd.f32 %v1077, %v832
    %v1084 = vadd.f32 %v1078, %v834
    %v1085 = vadd.f32 %v1079, %v836
    %v1086 = vadd.f32 %v1080, %v838
    %v1087 = vadd.f32 %v1081, %v840
    %v1088 = vadd.f32 %v1082, %v842
    %v1089 = vadd.f32 %v1083, %v850
    %v1090 = vadd.f32 %v1084, %v852
    %v1091 = vadd.f32 %v1085, %v854
    %v1092 = vadd.f32 %v1086, %v856
    %v1093 = vadd.f32 %v1087, %v858
    %v1094 = vadd.f32 %v1088, %v860
    %v1095 = vadd.f32 %v1089, %v868
    %v1096 = vadd.f32 %v1090, %v870
    %v1097 = vadd.f32 %v1091, %v872
    %v1098 = vadd.f32 %v1092, %v874
    %v1099 = vadd.f32 %v1093, %v876
    %v1100 = vadd.f32 %v1094, %v878
    %v1101 = vadd.f32 %v1095, %v886
    %v1102 = vadd.f32 %v1096, %v888
    %v1103 = vadd.f32 %v1097, %v890
    %v1104 = vadd.f32 %v1098, %v892
    %v1105 = vadd.f32 %v1099, %v894
    %v1106 = vadd.f32 %v1100, %v896
    %v1107 = vmul.f32 %v904, %v904
    %v1108 = vmul.f32 %v906, %v906
    %v1109 = vmul.f32 %v908, %v908
    %v1110 = vmul.f32 %v910, %v910
    %v1111 = vmul.f32 %v912, %v912
    %v1112 = vmul.f32 %v914, %v914
    %v1113 = vlog2.pop %v897
    %v1114 = vmul.f32 %v1113, 0.6931472
    %v1115 = vlog2.pop %v898
    %v1116 = vmul.f32 %v1115, 0.6931472
    %v1117 = vlog2.pop %v899
    %v1118 = vmul.f32 %v1117, 0.6931472
    %v1119 = vlog2.pop %v900
    %v1120 = vmul.f32 %v1119, 0.6931472
    %v1121 = vlog2.pop %v901
    %v1122 = vmul.f32 %v1121, 0.6931472
    %v1123 = vlog2.pop %v902
    %v1124 = vmul.f32 %v1123, 0.6931472
    %v1125 = vmul.f32 %v904, 0.5
    %v1126 = vmul.f32 %v906, 0.5
    %v1127 = vmul.f32 %v908, 0.5
    %v1128 = vmul.f32 %v910, 0.5
    %v1129 = vmul.f32 %v912, 0.5
    %v1130 = vmul.f32 %v914, 0.5
    %v1131 = vsub.f32 %v1114, %v1125
    %v1132 = vsub.f32 %v1116, %v1126
    %v1133 = vsub.f32 %v1118, %v1127
    %v1134 = vsub.f32 %v1120, %v1128
    %v1135 = vsub.f32 %v1122, %v1129
    %v1136 = vsub.f32 %v1124, %v1130
    %v1137 = vrcp.pop 252.0
    %v1138 = vmul.f32 %v1107, %v1137
    %v1139 = vmul.f32 %v1108, %v1137
    %v1140 = vmul.f32 %v1109, %v1137
    %v1141 = vmul.f32 %v1110, %v1137
    %v1142 = vmul.f32 %v1111, %v1137
    %v1143 = vmul.f32 %v1112, %v1137
    %v1144 = vsub.f32 0.008333334, %v1138
    %v1145 = vsub.f32 0.008333334, %v1139
    %v1146 = vsub.f32 0.008333334, %v1140
    %v1147 = vsub.f32 0.008333334, %v1141
    %v1148 = vsub.f32 0.008333334, %v1142
    %v1149 = vsub.f32 0.008333334, %v1143
    %v1150 = vmul.f32 %v1107, %v1144
    %v1151 = vmul.f32 %v1108, %v1145
    %v1152 = vmul.f32 %v1109, %v1146
    %v1153 = vmul.f32 %v1110, %v1147
    %v1154 = vmul.f32 %v1111, %v1148
    %v1155 = vmul.f32 %v1112, %v1149
    %v1156 = vsub.f32 0.083333336, %v1150
    %v1157 = vsub.f32 0.083333336, %v1151
    %v1158 = vsub.f32 0.083333336, %v1152
    %v1159 = vsub.f32 0.083333336, %v1153
    %v1160 = vsub.f32 0.083333336, %v1154
    %v1161 = vsub.f32 0.083333336, %v1155
    %v1162 = vmul.f32 %v1107, %v1156
    %v1163 = vmul.f32 %v1108, %v1157
    %v1164 = vmul.f32 %v1109, %v1158
    %v1165 = vmul.f32 %v1110, %v1159
    %v1166 = vmul.f32 %v1111, %v1160
    %v1167 = vmul.f32 %v1112, %v1161
    %v1168 = vsub.f32 %v1131, %v1162
    %v1169 = vsub.f32 %v1132, %v1163
    %v1170 = vsub.f32 %v1133, %v1164
    %v1171 = vsub.f32 %v1134, %v1165
    %v1172 = vsub.f32 %v1135, %v1166
    %v1173 = vsub.f32 %v1136, %v1167
    %v1174 = vsub.f32 %v1168, %v1101
    %v1175 = vsub.f32 %v1169, %v1102
    %v1176 = vsub.f32 %v1170, %v1103
    %v1177 = vsub.f32 %v1171, %v1104
    %v1178 = vsub.f32 %v1172, %v1105
    %v1179 = vsub.f32 %v1173, %v1106
    %s1180 = sld [smem:[#allocation2]]
    %v1182 = vlaneseq
    %v1183 = vshrl.u32 %v1182, 7
    %v1184 = vsub.s32 0, %v1183
    %v1185 = vrot.slane %v764, %v1184
    %v1187 = vsub.f32 %v765, %v1185
    %v1188 = vsub.f32 %v766, %v1185
    %v1189 = vsub.f32 %v767, %v1185
    %v1190 = vsub.f32 %v768, %v1185
    %v1191 = vsub.f32 %v769, %v1185
    %v1192 = vsub.f32 %v770, %v1185
    %v1193 = vmul.f32 %v1187, %v1174
    %v1194 = vmul.f32 %v1188, %v1175
    %v1195 = vmul.f32 %v1189, %v1176
    %v1196 = vmul.f32 %v1190, %v1177
    %v1197 = vmul.f32 %v1191, %v1178
    %v1198 = vmul.f32 %v1192, %v1179
    %1199 = vadd.xlane.f32.xlu0 %v1193
    %v1200 = vpop.xlane.xlu0 %1199
    %1201 = vadd.xlane.f32.xlu0 %v1194
    %v1202 = vpop.xlane.xlu0 %1201
    %1203 = vadd.xlane.f32.xlu0 %v1195
    %v1204 = vpop.xlane.xlu0 %1203
    %1205 = vadd.xlane.f32.xlu0 %v1196
    %v1206 = vpop.xlane.xlu0 %1205
    %1207 = vadd.xlane.f32.xlu0 %v1197
    %v1208 = vpop.xlane.xlu0 %1207
    %1209 = vadd.xlane.f32.xlu0 %v1198
    %v1210 = vpop.xlane.xlu0 %1209
    %v1211 = vadd.f32 %v1200, %v1202
    %v1212 = vadd.f32 %v1211, %v1204
    %v1213 = vadd.f32 %v1212, %v1206
    %v1214 = vadd.f32 %v1213, %v1208
    %v1215 = vadd.f32 %v1214, %v1210
    %v1216 = vrot.slane %v1215, 4
    %v1217 = vadd.f32 %v1215, %v1216
    %v1218 = vrot.slane %v1217, 2
    %v1219 = vadd.f32 %v1217, %v1218
    %v1220 = vrot.slane %v1219, 1
    %v1221 = vadd.f32 %v1219, %v1220
    %v1222 = vstv %s1180
    %v1223 = vadd.f32 %v1222, %v1221
    %1224 = vadd.xlane.f32.xlu0 %v1065
    %v1225 = vpop.xlane.xlu0 %1224
    %1226 = vadd.xlane.f32.xlu0 %v1066
    %v1227 = vpop.xlane.xlu0 %1226
    %1228 = vadd.xlane.f32.xlu0 %v1067
    %v1229 = vpop.xlane.xlu0 %1228
    %1230 = vadd.xlane.f32.xlu0 %v1068
    %v1231 = vpop.xlane.xlu0 %1230
    %1232 = vadd.xlane.f32.xlu0 %v1069
    %v1233 = vpop.xlane.xlu0 %1232
    %1234 = vadd.xlane.f32.xlu0 %v1070
    %v1235 = vpop.xlane.xlu0 %1234
    %v1236 = vadd.f32 %v1225, %v1227
    %v1237 = vadd.f32 %v1236, %v1229
    %v1238 = vadd.f32 %v1237, %v1231
    %v1239 = vadd.f32 %v1238, %v1233
    %v1240 = vadd.f32 %v1239, %v1235
    %v1241 = vrot.slane %v1240, 4
    %v1242 = vadd.f32 %v1240, %v1241
    %v1243 = vrot.slane %v1242, 2
    %v1244 = vadd.f32 %v1242, %v1243
    %v1245 = vrot.slane %v1244, 1
    %v1246 = vadd.f32 %v1244, %v1245
    %v1247 = vsub.f32 %v1223, %v1246
    %v1248 = vmul.f32 %v763, 0.7
    %v1249 = vadd.f32 %v367, %v1248
    %v1250 = vadd.f32 %v1249, %v1247
    %vm1251 = vcmask 0
    %1252 = vst.msk [vmem:[#allocation3] sm:$0x1] %vm1251, %v1250
    // Predicated region
    $region22: #{_loss_impl.1} parent=1 // pred_check
      _
    $region23: #{_loss_impl.1} parent=1 // pred_check_branch
      %1254 = sbr.rel (0) target = $region25
    $region24: #{_loss_impl.1} parent=1 // pred_region
      %s1256 = ssub.s32 16, 16
      %1257 = vsyncadd [#allocation4], %s1256
      %s1259 = sshll.u32 [#allocation3], 4
      %s1260 = int_to_ptr.vmem [resolvable:$true] %s1259
      %1262 = dma.vmem_to_hbm [thread:$0]  %s1260, 16, %s5, [#allocation4]
    $region25: #{_loss_impl.1} parent=1 // pred_fallthru
      _
    // Predicated region
    $region26: #{_loss_impl.1} parent=1 // pred_check
      _
    $region27: #{_loss_impl.1} parent=1 // pred_check_branch
      %1264 = sbr.rel (0) target = $region29
    $region28: #{_loss_impl.1} parent=1 // pred_region
      %1265 = dma.done [#allocation4], 16
    $region29: #{_loss_impl.1} parent=1 // pred_fallthru
      _
    %1266 = vsyncpa [#allocation4], 1

</llo_original>
